<compile_context>
chip_gen: v5e
topology: v5e:2x2
jax: 0.10.0
libtpu: 0.0.40
codegen_flags: <defaults>
</compile_context>

<pallas_src>
import jax
import jax.numpy as jnp
from jax import lax
from jax.experimental import pallas as pl
from jax.experimental.pallas import tpu as pltpu

EMBEDDING_DIM = 100                       # C in the reference module
BLOCK_SIZE = 64                           # max sequence length
NUM_HEADS = 4
HEAD_SIZE = EMBEDDING_DIM // NUM_HEADS    # 25
FF_HIDDEN = 4 * EMBEDDING_DIM             # 400
LN_EPS = 1e-5

# Lane-dense padded sizes used inside the kernel.
C_PAD = 128                               # channels 100 -> 128 (one vreg of lanes)
HEAD_PAD = C_PAD // NUM_HEADS             # head size 25 -> 32 (disjoint lane blocks)
FF_PAD = 512                              # FFN hidden 400 -> 512
MAX_BATCH_BLOCK = 8                       # batch elements per grid step


def block_kernel(
    x_ref,        # (BB, T, C_PAD)        padded lanes are zero
    wqkv_ref,     # (C_PAD, 3*C_PAD)      [q heads | k heads | v heads], scale in q
    proj_w_ref,   # (C_PAD, C_PAD)
    proj_b_ref,   # (1, C_PAD)
    ln1_g_ref, ln1_b_ref,   # (1, C_PAD)
    ln2_g_ref, ln2_b_ref,   # (1, C_PAD)
    w1_ref,       # (C_PAD, FF_PAD)
    b1_ref,       # (1, FF_PAD)
    w2_ref,       # (FF_PAD, C_PAD)
    b2_ref,       # (1, C_PAD)
    out_ref,      # (BB, T, C_PAD)
):
    BB, T, Cp = x_ref.shape
    M = BB * T

    x = x_ref[...].reshape(M, Cp).astype(jnp.float32)   # layout-trivial (T % 8 == 0)

    lane = lax.broadcasted_iota(jnp.int32, (1, Cp), 1)
    cmask = (lane < EMBEDDING_DIM).astype(jnp.float32)   # real-channel lane mask
    inv_c = 1.0 / EMBEDDING_DIM

    def layernorm(v, g, b):
        # padded lanes of v are zero -> plain sum == sum over the 100 real lanes
        mean = jnp.sum(v, axis=-1, keepdims=True) * inv_c
        cent = v - mean
        var = jnp.sum(cent * cent * cmask, axis=-1, keepdims=True) * inv_c
        # g/b are zero in padded lanes -> output padded lanes stay zero
        return cent * lax.rsqrt(var + LN_EPS) * g + b

    # ---------------- LN1 + fused QKV projection (one matmul) ----------------
    h1 = layernorm(x, ln1_g_ref[...], ln1_b_ref[...])                      # (M, Cp)
    qkv = jnp.dot(h1, wqkv_ref[...], preferred_element_type=jnp.float32)   # (M, 3*Cp)
    q_all = qkv[:, 0:Cp]          # lane-aligned (free) slices
    k_all = qkv[:, Cp:2 * Cp]
    v_all = qkv[:, 2 * Cp:3 * Cp]

    # heads occupy disjoint 32-lane blocks -> select a head with a lane mask
    head_masks = [
        ((lane >= h * HEAD_PAD) & (lane < (h + 1) * HEAD_PAD)).astype(jnp.float32)
        for h in range(NUM_HEADS)
    ]
    q_heads = [q_all * head_masks[h] for h in range(NUM_HEADS)]
    v_heads = [v_all * head_masks[h] for h in range(NUM_HEADS)]

    # causal mask
    row = lax.broadcasted_iota(jnp.int32, (T, T), 0)
    col = lax.broadcasted_iota(jnp.int32, (T, T), 1)
    causal = row >= col
    neg_big = jnp.float32(-1e30)

    # ---------------- attention: only the (T, T) part is per batch ----------------
    o_rows = []
    for b in range(BB):
        r0, r1 = b * T, (b + 1) * T
        k_b = k_all[r0:r1, :]                            # (T, Cp) sublane slice
        o_b = jnp.zeros((T, Cp), jnp.float32)
        for h in range(NUM_HEADS):
            q_bh = q_heads[h][r0:r1, :]                  # nonzero only in head-h lanes
            # contraction over all 128 lanes == contraction over head-h features
            s = lax.dot_general(q_bh, k_b, (((1,), (1,)), ((), ())),
                                preferred_element_type=jnp.float32)   # (T, T)
            s = jnp.where(causal, s, neg_big)
            s = s - jnp.max(s, axis=-1, keepdims=True)
            p = jnp.exp(s)
            inv_l = pl.reciprocal(jnp.sum(p, axis=-1, keepdims=True), approx=True)
            p = p * inv_l
            # head-h output lands in head-h's lane block; other lanes stay zero
            o_b = o_b + jnp.dot(p, v_heads[h][r0:r1, :],
                                preferred_element_type=jnp.float32)
        o_rows.append(o_b)
    o_all = jnp.concatenate(o_rows, axis=0)              # (M, Cp) head-concat slab

    # ---------------- output projection (single K=128 matmul) + residual ----------------
    sa = jnp.dot(o_all, proj_w_ref[...],
                 preferred_element_type=jnp.float32) + proj_b_ref[...]
    x2 = x + sa                                          # padded lanes stay zero

    # ---------------- LN2 + FFN + residual ----------------
    h2 = layernorm(x2, ln2_g_ref[...], ln2_b_ref[...])
    ff = jnp.dot(h2, w1_ref[...], preferred_element_type=jnp.float32) + b1_ref[...]
    ff = jnp.maximum(ff, 0.0)
    ff = jnp.dot(ff, w2_ref[...], preferred_element_type=jnp.float32) + b2_ref[...]

    out_ref[...] = (x2 + ff).reshape(BB, T, Cp).astype(out_ref.dtype)


def init_params(key, dtype=jnp.float32):
    """Logical (unpadded) parameters, act @ W layout (torch Linear weight transposed)."""
    C, NH, HS = EMBEDDING_DIM, NUM_HEADS, HEAD_SIZE
    ks = jax.random.split(key, 8)
    s = 0.02
    return {
        "wq": jax.random.normal(ks[0], (NH, C, HS), dtype) * s,
        "wk": jax.random.normal(ks[1], (NH, C, HS), dtype) * s,
        "wv": jax.random.normal(ks[2], (NH, C, HS), dtype) * s,
        "proj_w": jax.random.normal(ks[3], (C, C), dtype) * s,   # rows = concat(head) features
        "proj_b": jax.random.normal(ks[4], (C,), dtype) * s,
        "ln1_g": jnp.ones((C,), dtype), "ln1_b": jnp.zeros((C,), dtype),
        "ln2_g": jnp.ones((C,), dtype), "ln2_b": jnp.zeros((C,), dtype),
        "w1": jax.random.normal(ks[5], (C, 4 * C), dtype) * s,
        "b1": jax.random.normal(ks[6], (4 * C,), dtype) * s,
        "w2": jax.random.normal(ks[7], (4 * C, C), dtype) * s,
        "b2": jnp.zeros((C,), dtype),
    }


def _prepare_weights(p):
    """Pad/fuse logical params into the lane-dense kernel layout."""
    C, Cp = EMBEDDING_DIM, C_PAD
    NH, HS, HSP = NUM_HEADS, HEAD_SIZE, HEAD_PAD
    FH, FHP = FF_HIDDEN, FF_PAD
    scale = float(C) ** (-0.5)      # reference module scales scores by C**-0.5

    def pad_heads(w):
        # (NH, C, HS) -> (Cp, NH*HSP): zero-pad each head to (Cp, HSP), concat on lanes
        wp = jnp.pad(w, ((0, 0), (0, Cp - C), (0, HSP - HS)))        # (NH, Cp, HSP)
        return jnp.concatenate([wp[h] for h in range(NH)], axis=1)   # (Cp, NH*HSP)

    wqkv = jnp.concatenate(
        [pad_heads(p["wq"] * scale), pad_heads(p["wk"]), pad_heads(p["wv"])], axis=1)

    # proj_w rows re-laid to padded head blocks: row (h*HSP + d) <- proj_w[h*HS + d]
    pw = p["proj_w"].reshape(NH, HS, C)
    pw = jnp.pad(pw, ((0, 0), (0, HSP - HS), (0, Cp - C))).reshape(NH * HSP, Cp)

    def row(v, n):
        return jnp.pad(v, (0, n - v.shape[0]))[None, :]

    return dict(
        wqkv=wqkv,
        proj_w=pw,
        proj_b=row(p["proj_b"], Cp),
        ln1_g=row(p["ln1_g"], Cp), ln1_b=row(p["ln1_b"], Cp),
        ln2_g=row(p["ln2_g"], Cp), ln2_b=row(p["ln2_b"], Cp),
        w1=jnp.pad(p["w1"], ((0, Cp - C), (0, FHP - FH))),
        b1=row(p["b1"], FHP),
        w2=jnp.pad(p["w2"], ((0, FHP - FH), (0, Cp - C))),
        b2=row(p["b2"], Cp),
    )


@jax.jit
def block_forward(x, params):
    B, T, C = x.shape
    assert C == EMBEDDING_DIM and T <= BLOCK_SIZE

    w = _prepare_weights(params)

    BB = min(B, MAX_BATCH_BLOCK)
    n_blocks = (B + BB - 1) // BB
    Bp = n_blocks * BB
    Tp = ((T + 7) // 8) * 8                      # sublane-align the sequence dim

    xp = jnp.pad(x, ((0, Bp - B), (0, Tp - T), (0, C_PAD - C)))

    weight_args = (w["wqkv"], w["proj_w"], w["proj_b"],
                   w["ln1_g"], w["ln1_b"], w["ln2_g"], w["ln2_b"],
                   w["w1"], w["b1"], w["w2"], w["b2"])

    def const_spec(shape):
        nd = len(shape)
        return pl.BlockSpec(shape, lambda i, _nd=nd: (0,) * _nd)   # grid-invariant

    in_specs = [pl.BlockSpec((BB, Tp, C_PAD), lambda i: (i, 0, 0))]
    in_specs += [const_spec(a.shape) for a in weight_args]

    flops = 2 * Bp * Tp * (3 * C_PAD * C_PAD            # fused QKV
                           + NUM_HEADS * 2 * Tp * C_PAD  # scores + p@v
                           + C_PAD * C_PAD               # output projection
                           + 2 * C_PAD * FF_PAD)         # FFN
    transcendentals = Bp * NUM_HEADS * Tp * Tp           # exp
    bytes_accessed = 2 * Bp * Tp * C_PAD * 4 + sum(a.size for a in weight_args) * 4

    yp = pl.pallas_call(
        block_kernel,
        out_shape=jax.ShapeDtypeStruct((Bp, Tp, C_PAD), x.dtype),
        grid=(n_blocks,),
        in_specs=in_specs,
        out_specs=pl.BlockSpec((BB, Tp, C_PAD), lambda i: (i, 0, 0)),
        compiler_params=pltpu.CompilerParams(
            dimension_semantics=("parallel",)),          # megacore-shardable batch axis
        cost_estimate=pl.CostEstimate(flops=flops,
                                      transcendentals=transcendentals,
                                      bytes_accessed=bytes_accessed),
    )(xp, *weight_args)

    return yp[:B, :T, :C]


def block_forward_ref(x, params):
    """Pure-JAX reference (unpadded, matches the PyTorch Block forward)."""
    p = params
    C = EMBEDDING_DIM

    def ln(v, g, b):
        m = jnp.mean(v, axis=-1, keepdims=True)
        var = jnp.mean((v - m) ** 2, axis=-1, keepdims=True)
        return (v - m) * lax.rsqrt(var + LN_EPS) * g + b

    h1 = ln(x, p["ln1_g"], p["ln1_b"])
    T = x.shape[1]
    causal = jnp.tril(jnp.ones((T, T), bool))
    outs = []
    for h in range(NUM_HEADS):
        q = h1 @ p["wq"][h]
        k = h1 @ p["wk"][h]
        v = h1 @ p["wv"][h]
        wei = (q @ jnp.swapaxes(k, -1, -2)) * (float(C) ** -0.5)
        wei = jnp.where(causal, wei, -jnp.inf)
        wei = jax.nn.softmax(wei, axis=-1)
        outs.append(wei @ v)
    sa = jnp.concatenate(outs, axis=-1) @ p["proj_w"] + p["proj_b"]
    x2 = x + sa
    h2 = ln(x2, p["ln2_g"], p["ln2_b"])
    ff = jnp.maximum(h2 @ p["w1"] + p["b1"], 0.0) @ p["w2"] + p["b2"]
    return x2 + ff


if __name__ == "__main__":
    key = jax.random.PRNGKey(0)
    k_x, k_p = jax.random.split(key)

    B, T = 2, 8
    x = jax.random.normal(k_x, (B, T, EMBEDDING_DIM), jnp.float32)
    params = init_params(k_p)

    out = jax.block_until_ready(block_forward(x, params))

    ref = block_forward_ref(x, params)
    assert out.shape == (B, T, EMBEDDING_DIM) and out.dtype == jnp.float32
    max_err = float(jnp.max(jnp.abs(out - ref)))
    assert jnp.allclose(out, ref, atol=2e-3, rtol=2e-3), f"mismatch vs reference (max err {max_err})"

    print("KERNEL_OK")
</pallas_src>

<mosaic_0001>
module attributes {stable_mosaic.version = 11 : i64} {
  func.func @block_kernel(%arg0: i32, %arg1: memref<2x8x128xf32, #tpu.memory_space<vmem>>, %arg2: memref<128x384xf32, #tpu.memory_space<vmem>>, %arg3: memref<128x128xf32, #tpu.memory_space<vmem>>, %arg4: memref<1x128xf32, #tpu.memory_space<vmem>>, %arg5: memref<1x128xf32, #tpu.memory_space<vmem>>, %arg6: memref<1x128xf32, #tpu.memory_space<vmem>>, %arg7: memref<1x128xf32, #tpu.memory_space<vmem>>, %arg8: memref<1x128xf32, #tpu.memory_space<vmem>>, %arg9: memref<128x512xf32, #tpu.memory_space<vmem>>, %arg10: memref<1x512xf32, #tpu.memory_space<vmem>>, %arg11: memref<512x128xf32, #tpu.memory_space<vmem>>, %arg12: memref<1x128xf32, #tpu.memory_space<vmem>>, %arg13: memref<2x8x128xf32, #tpu.memory_space<vmem>>) attributes {dimension_semantics = [#tpu.dimension_semantics<parallel>], iteration_bounds = array<i64: 1>, scalar_prefetch = 0 : i64, scratch_operands = 0 : i64, tpu.core_type = #tpu.core_type<tc>, window_params = [{transform_indices = @transform_0, window_bounds = array<i64: 2, 8, 128>}, {pipeline_mode = #tpu.pipeline_mode<synchronous>, transform_indices = @transform_1, window_bounds = array<i64: 128, 384>}, {pipeline_mode = #tpu.pipeline_mode<synchronous>, transform_indices = @transform_2, window_bounds = array<i64: 128, 128>}, {pipeline_mode = #tpu.pipeline_mode<synchronous>, transform_indices = @transform_3, window_bounds = array<i64: 1, 128>}, {pipeline_mode = #tpu.pipeline_mode<synchronous>, transform_indices = @transform_4, window_bounds = array<i64: 1, 128>}, {pipeline_mode = #tpu.pipeline_mode<synchronous>, transform_indices = @transform_5, window_bounds = array<i64: 1, 128>}, {pipeline_mode = #tpu.pipeline_mode<synchronous>, transform_indices = @transform_6, window_bounds = array<i64: 1, 128>}, {pipeline_mode = #tpu.pipeline_mode<synchronous>, transform_indices = @transform_7, window_bounds = array<i64: 1, 128>}, {pipeline_mode = #tpu.pipeline_mode<synchronous>, transform_indices = @transform_8, window_bounds = array<i64: 128, 512>}, {pipeline_mode = #tpu.pipeline_mode<synchronous>, transform_indices = @transform_9, window_bounds = array<i64: 1, 512>}, {pipeline_mode = #tpu.pipeline_mode<synchronous>, transform_indices = @transform_10, window_bounds = array<i64: 512, 128>}, {pipeline_mode = #tpu.pipeline_mode<synchronous>, transform_indices = @transform_11, window_bounds = array<i64: 1, 128>}, {transform_indices = @transform_12, window_bounds = array<i64: 2, 8, 128>}]} {
    %c0 = arith.constant 0 : index
    %c0_0 = arith.constant 0 : index
    %c0_1 = arith.constant 0 : index
    %0 = vector.load %arg1[%c0, %c0_0, %c0_1] : memref<2x8x128xf32, #tpu.memory_space<vmem>>, vector<2x8x128xf32>
    %1 = vector.shape_cast %0 : vector<2x8x128xf32> to vector<16x128xf32>
    %2 = tpu.iota {dimensions = array<i32: 1>} : vector<1x128xi32>
    %c100_i32 = arith.constant 100 : i32
    %3 = vector.broadcast %c100_i32 : i32 to vector<1x128xi32>
    %4 = arith.cmpi slt, %2, %3 : vector<1x128xi32>
    %5 = arith.extui %4 : vector<1x128xi1> to vector<1x128xi32>
    %6 = arith.sitofp %5 : vector<1x128xi32> to vector<1x128xf32>
    %c0_2 = arith.constant 0 : index
    %c0_3 = arith.constant 0 : index
    %7 = vector.load %arg5[%c0_2, %c0_3] : memref<1x128xf32, #tpu.memory_space<vmem>>, vector<1x128xf32>
    %c0_4 = arith.constant 0 : index
    %c0_5 = arith.constant 0 : index
    %8 = vector.load %arg6[%c0_4, %c0_5] : memref<1x128xf32, #tpu.memory_space<vmem>>, vector<1x128xf32>
    %cst = arith.constant dense<0.000000e+00> : vector<16xf32>
    %9 = vector.multi_reduction <add>, %1, %cst [1] : vector<16x128xf32> to vector<16xf32>
    %10 = vector.shape_cast %9 : vector<16xf32> to vector<16x1xf32>
    %cst_6 = arith.constant 0.00999999977 : f32
    %11 = vector.broadcast %cst_6 : f32 to vector<16x1xf32>
    %12 = arith.mulf %10, %11 : vector<16x1xf32>
    %13 = vector.broadcast %12 : vector<16x1xf32> to vector<16x128xf32>
    %14 = arith.subf %1, %13 : vector<16x128xf32>
    %15 = arith.mulf %14, %14 : vector<16x128xf32>
    %16 = vector.broadcast %6 : vector<1x128xf32> to vector<16x128xf32>
    %17 = arith.mulf %15, %16 : vector<16x128xf32>
    %cst_7 = arith.constant dense<0.000000e+00> : vector<16xf32>
    %18 = vector.multi_reduction <add>, %17, %cst_7 [1] : vector<16x128xf32> to vector<16xf32>
    %19 = vector.shape_cast %18 : vector<16xf32> to vector<16x1xf32>
    %cst_8 = arith.constant 0.00999999977 : f32
    %20 = vector.broadcast %cst_8 : f32 to vector<16x1xf32>
    %21 = arith.mulf %19, %20 : vector<16x1xf32>
    %cst_9 = arith.constant 9.99999974E-6 : f32
    %22 = vector.broadcast %cst_9 : f32 to vector<16x1xf32>
    %23 = arith.addf %21, %22 : vector<16x1xf32>
    %24 = math.rsqrt %23 : vector<16x1xf32>
    %25 = vector.broadcast %24 : vector<16x1xf32> to vector<16x128xf32>
    %26 = arith.mulf %14, %25 : vector<16x128xf32>
    %27 = vector.broadcast %7 : vector<1x128xf32> to vector<16x128xf32>
    %28 = arith.mulf %26, %27 : vector<16x128xf32>
    %29 = vector.broadcast %8 : vector<1x128xf32> to vector<16x128xf32>
    %30 = arith.addf %28, %29 : vector<16x128xf32>
    %c0_10 = arith.constant 0 : index
    %c0_11 = arith.constant 0 : index
    %31 = vector.load %arg2[%c0_10, %c0_11] : memref<128x384xf32, #tpu.memory_space<vmem>>, vector<128x384xf32>
    %cst_12 = arith.constant dense<0.000000e+00> : vector<16x384xf32>
    %32 = tpu.matmul %30, %31, %cst_12 {dimension_numbers = #tpu.dot_dimension_numbers<[1], [0], [0], [1], [0, 0, 1, 1], [], []>} : vector<16x128xf32>, vector<128x384xf32>, vector<16x384xf32> -> vector<16x384xf32>
    %33 = vector.extract_strided_slice %32 {offsets = [0, 0], sizes = [16, 128], strides = [1, 1]} : vector<16x384xf32> to vector<16x128xf32>
    %34 = vector.extract_strided_slice %32 {offsets = [0, 128], sizes = [16, 128], strides = [1, 1]} : vector<16x384xf32> to vector<16x128xf32>
    %35 = vector.extract_strided_slice %32 {offsets = [0, 256], sizes = [16, 128], strides = [1, 1]} : vector<16x384xf32> to vector<16x128xf32>
    %c0_i32 = arith.constant 0 : i32
    %36 = vector.broadcast %c0_i32 : i32 to vector<1x128xi32>
    %37 = arith.cmpi sge, %2, %36 : vector<1x128xi32>
    %c32_i32 = arith.constant 32 : i32
    %38 = vector.broadcast %c32_i32 : i32 to vector<1x128xi32>
    %39 = arith.cmpi slt, %2, %38 : vector<1x128xi32>
    %40 = arith.andi %37, %39 : vector<1x128xi1>
    %41 = arith.extui %40 : vector<1x128xi1> to vector<1x128xi32>
    %42 = arith.sitofp %41 : vector<1x128xi32> to vector<1x128xf32>
    %c32_i32_13 = arith.constant 32 : i32
    %43 = vector.broadcast %c32_i32_13 : i32 to vector<1x128xi32>
    %44 = arith.cmpi sge, %2, %43 : vector<1x128xi32>
    %c64_i32 = arith.constant 64 : i32
    %45 = vector.broadcast %c64_i32 : i32 to vector<1x128xi32>
    %46 = arith.cmpi slt, %2, %45 : vector<1x128xi32>
    %47 = arith.andi %44, %46 : vector<1x128xi1>
    %48 = arith.extui %47 : vector<1x128xi1> to vector<1x128xi32>
    %49 = arith.sitofp %48 : vector<1x128xi32> to vector<1x128xf32>
    %c64_i32_14 = arith.constant 64 : i32
    %50 = vector.broadcast %c64_i32_14 : i32 to vector<1x128xi32>
    %51 = arith.cmpi sge, %2, %50 : vector<1x128xi32>
    %c96_i32 = arith.constant 96 : i32
    %52 = vector.broadcast %c96_i32 : i32 to vector<1x128xi32>
    %53 = arith.cmpi slt, %2, %52 : vector<1x128xi32>
    %54 = arith.andi %51, %53 : vector<1x128xi1>
    %55 = arith.extui %54 : vector<1x128xi1> to vector<1x128xi32>
    %56 = arith.sitofp %55 : vector<1x128xi32> to vector<1x128xf32>
    %c96_i32_15 = arith.constant 96 : i32
    %57 = vector.broadcast %c96_i32_15 : i32 to vector<1x128xi32>
    %58 = arith.cmpi sge, %2, %57 : vector<1x128xi32>
    %c128_i32 = arith.constant 128 : i32
    %59 = vector.broadcast %c128_i32 : i32 to vector<1x128xi32>
    %60 = arith.cmpi slt, %2, %59 : vector<1x128xi32>
    %61 = arith.andi %58, %60 : vector<1x128xi1>
    %62 = arith.extui %61 : vector<1x128xi1> to vector<1x128xi32>
    %63 = arith.sitofp %62 : vector<1x128xi32> to vector<1x128xf32>
    %64 = vector.broadcast %42 : vector<1x128xf32> to vector<16x128xf32>
    %65 = arith.mulf %33, %64 : vector<16x128xf32>
    %66 = vector.broadcast %49 : vector<1x128xf32> to vector<16x128xf32>
    %67 = arith.mulf %33, %66 : vector<16x128xf32>
    %68 = vector.broadcast %56 : vector<1x128xf32> to vector<16x128xf32>
    %69 = arith.mulf %33, %68 : vector<16x128xf32>
    %70 = vector.broadcast %63 : vector<1x128xf32> to vector<16x128xf32>
    %71 = arith.mulf %33, %70 : vector<16x128xf32>
    %72 = vector.broadcast %42 : vector<1x128xf32> to vector<16x128xf32>
    %73 = arith.mulf %35, %72 : vector<16x128xf32>
    %74 = vector.broadcast %49 : vector<1x128xf32> to vector<16x128xf32>
    %75 = arith.mulf %35, %74 : vector<16x128xf32>
    %76 = vector.broadcast %56 : vector<1x128xf32> to vector<16x128xf32>
    %77 = arith.mulf %35, %76 : vector<16x128xf32>
    %78 = vector.broadcast %63 : vector<1x128xf32> to vector<16x128xf32>
    %79 = arith.mulf %35, %78 : vector<16x128xf32>
    %80 = tpu.iota {dimensions = array<i32: 0>} : vector<8x8xi32>
    %81 = tpu.iota {dimensions = array<i32: 1>} : vector<8x8xi32>
    %82 = arith.cmpi sge, %80, %81 : vector<8x8xi32>
    %83 = vector.extract_strided_slice %34 {offsets = [0, 0], sizes = [8, 128], strides = [1, 1]} : vector<16x128xf32> to vector<8x128xf32>
    %cst_16 = arith.constant 0.000000e+00 : f32
    %84 = vector.broadcast %cst_16 : f32 to vector<8x128xf32>
    %85 = vector.extract_strided_slice %65 {offsets = [0, 0], sizes = [8, 128], strides = [1, 1]} : vector<16x128xf32> to vector<8x128xf32>
    %cst_17 = arith.constant dense<0.000000e+00> : vector<8x8xf32>
    %86 = tpu.matmul %85, %83, %cst_17 {dimension_numbers = #tpu.dot_dimension_numbers<[1], [1], [0], [0], [0, 0, 1, 0], [], []>} : vector<8x128xf32>, vector<8x128xf32>, vector<8x8xf32> -> vector<8x8xf32>
    %cst_18 = arith.constant -1.000000e+30 : f32
    %87 = vector.broadcast %cst_18 : f32 to vector<8x8xf32>
    %88 = arith.select %82, %86, %87 : vector<8x8xi1>, vector<8x8xf32>
    %cst_19 = arith.constant dense<0xFF800000> : vector<8xf32>
    %89 = vector.multi_reduction <maximumf>, %88, %cst_19 [1] : vector<8x8xf32> to vector<8xf32>
    %90 = vector.shape_cast %89 : vector<8xf32> to vector<8x1xf32>
    %91 = vector.broadcast %90 : vector<8x1xf32> to vector<8x8xf32>
    %92 = arith.subf %88, %91 : vector<8x8xf32>
    %93 = math.exp %92 : vector<8x8xf32>
    %cst_20 = arith.constant dense<0.000000e+00> : vector<8xf32>
    %94 = vector.multi_reduction <add>, %93, %cst_20 [1] : vector<8x8xf32> to vector<8xf32>
    %95 = vector.shape_cast %94 : vector<8xf32> to vector<8x1xf32>
    %96 = tpu.reciprocal %95 {approx = true} : vector<8x1xf32> -> vector<8x1xf32>
    %97 = vector.broadcast %96 : vector<8x1xf32> to vector<8x8xf32>
    %98 = arith.mulf %93, %97 : vector<8x8xf32>
    %99 = vector.extract_strided_slice %73 {offsets = [0, 0], sizes = [8, 128], strides = [1, 1]} : vector<16x128xf32> to vector<8x128xf32>
    %cst_21 = arith.constant dense<0.000000e+00> : vector<8x128xf32>
    %100 = tpu.matmul %98, %99, %cst_21 {dimension_numbers = #tpu.dot_dimension_numbers<[1], [0], [0], [1], [0, 0, 1, 1], [], []>} : vector<8x8xf32>, vector<8x128xf32>, vector<8x128xf32> -> vector<8x128xf32>
    %101 = arith.addf %84, %100 : vector<8x128xf32>
    %102 = vector.extract_strided_slice %67 {offsets = [0, 0], sizes = [8, 128], strides = [1, 1]} : vector<16x128xf32> to vector<8x128xf32>
    %cst_22 = arith.constant dense<0.000000e+00> : vector<8x8xf32>
    %103 = tpu.matmul %102, %83, %cst_22 {dimension_numbers = #tpu.dot_dimension_numbers<[1], [1], [0], [0], [0, 0, 1, 0], [], []>} : vector<8x128xf32>, vector<8x128xf32>, vector<8x8xf32> -> vector<8x8xf32>
    %cst_23 = arith.constant -1.000000e+30 : f32
    %104 = vector.broadcast %cst_23 : f32 to vector<8x8xf32>
    %105 = arith.select %82, %103, %104 : vector<8x8xi1>, vector<8x8xf32>
    %cst_24 = arith.constant dense<0xFF800000> : vector<8xf32>
    %106 = vector.multi_reduction <maximumf>, %105, %cst_24 [1] : vector<8x8xf32> to vector<8xf32>
    %107 = vector.shape_cast %106 : vector<8xf32> to vector<8x1xf32>
    %108 = vector.broadcast %107 : vector<8x1xf32> to vector<8x8xf32>
    %109 = arith.subf %105, %108 : vector<8x8xf32>
    %110 = math.exp %109 : vector<8x8xf32>
    %cst_25 = arith.constant dense<0.000000e+00> : vector<8xf32>
    %111 = vector.multi_reduction <add>, %110, %cst_25 [1] : vector<8x8xf32> to vector<8xf32>
    %112 = vector.shape_cast %111 : vector<8xf32> to vector<8x1xf32>
    %113 = tpu.reciprocal %112 {approx = true} : vector<8x1xf32> -> vector<8x1xf32>
    %114 = vector.broadcast %113 : vector<8x1xf32> to vector<8x8xf32>
    %115 = arith.mulf %110, %114 : vector<8x8xf32>
    %116 = vector.extract_strided_slice %75 {offsets = [0, 0], sizes = [8, 128], strides = [1, 1]} : vector<16x128xf32> to vector<8x128xf32>
    %cst_26 = arith.constant dense<0.000000e+00> : vector<8x128xf32>
    %117 = tpu.matmul %115, %116, %cst_26 {dimension_numbers = #tpu.dot_dimension_numbers<[1], [0], [0], [1], [0, 0, 1, 1], [], []>} : vector<8x8xf32>, vector<8x128xf32>, vector<8x128xf32> -> vector<8x128xf32>
    %118 = arith.addf %101, %117 : vector<8x128xf32>
    %119 = vector.extract_strided_slice %69 {offsets = [0, 0], sizes = [8, 128], strides = [1, 1]} : vector<16x128xf32> to vector<8x128xf32>
    %cst_27 = arith.constant dense<0.000000e+00> : vector<8x8xf32>
    %120 = tpu.matmul %119, %83, %cst_27 {dimension_numbers = #tpu.dot_dimension_numbers<[1], [1], [0], [0], [0, 0, 1, 0], [], []>} : vector<8x128xf32>, vector<8x128xf32>, vector<8x8xf32> -> vector<8x8xf32>
    %cst_28 = arith.constant -1.000000e+30 : f32
    %121 = vector.broadcast %cst_28 : f32 to vector<8x8xf32>
    %122 = arith.select %82, %120, %121 : vector<8x8xi1>, vector<8x8xf32>
    %cst_29 = arith.constant dense<0xFF800000> : vector<8xf32>
    %123 = vector.multi_reduction <maximumf>, %122, %cst_29 [1] : vector<8x8xf32> to vector<8xf32>
    %124 = vector.shape_cast %123 : vector<8xf32> to vector<8x1xf32>
    %125 = vector.broadcast %124 : vector<8x1xf32> to vector<8x8xf32>
    %126 = arith.subf %122, %125 : vector<8x8xf32>
    %127 = math.exp %126 : vector<8x8xf32>
    %cst_30 = arith.constant dense<0.000000e+00> : vector<8xf32>
    %128 = vector.multi_reduction <add>, %127, %cst_30 [1] : vector<8x8xf32> to vector<8xf32>
    %129 = vector.shape_cast %128 : vector<8xf32> to vector<8x1xf32>
    %130 = tpu.reciprocal %129 {approx = true} : vector<8x1xf32> -> vector<8x1xf32>
    %131 = vector.broadcast %130 : vector<8x1xf32> to vector<8x8xf32>
    %132 = arith.mulf %127, %131 : vector<8x8xf32>
    %133 = vector.extract_strided_slice %77 {offsets = [0, 0], sizes = [8, 128], strides = [1, 1]} : vector<16x128xf32> to vector<8x128xf32>
    %cst_31 = arith.constant dense<0.000000e+00> : vector<8x128xf32>
    %134 = tpu.matmul %132, %133, %cst_31 {dimension_numbers = #tpu.dot_dimension_numbers<[1], [0], [0], [1], [0, 0, 1, 1], [], []>} : vector<8x8xf32>, vector<8x128xf32>, vector<8x128xf32> -> vector<8x128xf32>
    %135 = arith.addf %118, %134 : vector<8x128xf32>
    %136 = vector.extract_strided_slice %71 {offsets = [0, 0], sizes = [8, 128], strides = [1, 1]} : vector<16x128xf32> to vector<8x128xf32>
    %cst_32 = arith.constant dense<0.000000e+00> : vector<8x8xf32>
    %137 = tpu.matmul %136, %83, %cst_32 {dimension_numbers = #tpu.dot_dimension_numbers<[1], [1], [0], [0], [0, 0, 1, 0], [], []>} : vector<8x128xf32>, vector<8x128xf32>, vector<8x8xf32> -> vector<8x8xf32>
    %cst_33 = arith.constant -1.000000e+30 : f32
    %138 = vector.broadcast %cst_33 : f32 to vector<8x8xf32>
    %139 = arith.select %82, %137, %138 : vector<8x8xi1>, vector<8x8xf32>
    %cst_34 = arith.constant dense<0xFF800000> : vector<8xf32>
    %140 = vector.multi_reduction <maximumf>, %139, %cst_34 [1] : vector<8x8xf32> to vector<8xf32>
    %141 = vector.shape_cast %140 : vector<8xf32> to vector<8x1xf32>
    %142 = vector.broadcast %141 : vector<8x1xf32> to vector<8x8xf32>
    %143 = arith.subf %139, %142 : vector<8x8xf32>
    %144 = math.exp %143 : vector<8x8xf32>
    %cst_35 = arith.constant dense<0.000000e+00> : vector<8xf32>
    %145 = vector.multi_reduction <add>, %144, %cst_35 [1] : vector<8x8xf32> to vector<8xf32>
    %146 = vector.shape_cast %145 : vector<8xf32> to vector<8x1xf32>
    %147 = tpu.reciprocal %146 {approx = true} : vector<8x1xf32> -> vector<8x1xf32>
    %148 = vector.broadcast %147 : vector<8x1xf32> to vector<8x8xf32>
    %149 = arith.mulf %144, %148 : vector<8x8xf32>
    %150 = vector.extract_strided_slice %79 {offsets = [0, 0], sizes = [8, 128], strides = [1, 1]} : vector<16x128xf32> to vector<8x128xf32>
    %cst_36 = arith.constant dense<0.000000e+00> : vector<8x128xf32>
    %151 = tpu.matmul %149, %150, %cst_36 {dimension_numbers = #tpu.dot_dimension_numbers<[1], [0], [0], [1], [0, 0, 1, 1], [], []>} : vector<8x8xf32>, vector<8x128xf32>, vector<8x128xf32> -> vector<8x128xf32>
    %152 = arith.addf %135, %151 : vector<8x128xf32>
    %153 = vector.extract_strided_slice %34 {offsets = [8, 0], sizes = [8, 128], strides = [1, 1]} : vector<16x128xf32> to vector<8x128xf32>
    %cst_37 = arith.constant 0.000000e+00 : f32
    %154 = vector.broadcast %cst_37 : f32 to vector<8x128xf32>
    %155 = vector.extract_strided_slice %65 {offsets = [8, 0], sizes = [8, 128], strides = [1, 1]} : vector<16x128xf32> to vector<8x128xf32>
    %cst_38 = arith.constant dense<0.000000e+00> : vector<8x8xf32>
    %156 = tpu.matmul %155, %153, %cst_38 {dimension_numbers = #tpu.dot_dimension_numbers<[1], [1], [0], [0], [0, 0, 1, 0], [], []>} : vector<8x128xf32>, vector<8x128xf32>, vector<8x8xf32> -> vector<8x8xf32>
    %cst_39 = arith.constant -1.000000e+30 : f32
    %157 = vector.broadcast %cst_39 : f32 to vector<8x8xf32>
    %158 = arith.select %82, %156, %157 : vector<8x8xi1>, vector<8x8xf32>
    %cst_40 = arith.constant dense<0xFF800000> : vector<8xf32>
    %159 = vector.multi_reduction <maximumf>, %158, %cst_40 [1] : vector<8x8xf32> to vector<8xf32>
    %160 = vector.shape_cast %159 : vector<8xf32> to vector<8x1xf32>
    %161 = vector.broadcast %160 : vector<8x1xf32> to vector<8x8xf32>
    %162 = arith.subf %158, %161 : vector<8x8xf32>
    %163 = math.exp %162 : vector<8x8xf32>
    %cst_41 = arith.constant dense<0.000000e+00> : vector<8xf32>
    %164 = vector.multi_reduction <add>, %163, %cst_41 [1] : vector<8x8xf32> to vector<8xf32>
    %165 = vector.shape_cast %164 : vector<8xf32> to vector<8x1xf32>
    %166 = tpu.reciprocal %165 {approx = true} : vector<8x1xf32> -> vector<8x1xf32>
    %167 = vector.broadcast %166 : vector<8x1xf32> to vector<8x8xf32>
    %168 = arith.mulf %163, %167 : vector<8x8xf32>
    %169 = vector.extract_strided_slice %73 {offsets = [8, 0], sizes = [8, 128], strides = [1, 1]} : vector<16x128xf32> to vector<8x128xf32>
    %cst_42 = arith.constant dense<0.000000e+00> : vector<8x128xf32>
    %170 = tpu.matmul %168, %169, %cst_42 {dimension_numbers = #tpu.dot_dimension_numbers<[1], [0], [0], [1], [0, 0, 1, 1], [], []>} : vector<8x8xf32>, vector<8x128xf32>, vector<8x128xf32> -> vector<8x128xf32>
    %171 = arith.addf %154, %170 : vector<8x128xf32>
    %172 = vector.extract_strided_slice %67 {offsets = [8, 0], sizes = [8, 128], strides = [1, 1]} : vector<16x128xf32> to vector<8x128xf32>
    %cst_43 = arith.constant dense<0.000000e+00> : vector<8x8xf32>
    %173 = tpu.matmul %172, %153, %cst_43 {dimension_numbers = #tpu.dot_dimension_numbers<[1], [1], [0], [0], [0, 0, 1, 0], [], []>} : vector<8x128xf32>, vector<8x128xf32>, vector<8x8xf32> -> vector<8x8xf32>
    %cst_44 = arith.constant -1.000000e+30 : f32
    %174 = vector.broadcast %cst_44 : f32 to vector<8x8xf32>
    %175 = arith.select %82, %173, %174 : vector<8x8xi1>, vector<8x8xf32>
    %cst_45 = arith.constant dense<0xFF800000> : vector<8xf32>
    %176 = vector.multi_reduction <maximumf>, %175, %cst_45 [1] : vector<8x8xf32> to vector<8xf32>
    %177 = vector.shape_cast %176 : vector<8xf32> to vector<8x1xf32>
    %178 = vector.broadcast %177 : vector<8x1xf32> to vector<8x8xf32>
    %179 = arith.subf %175, %178 : vector<8x8xf32>
    %180 = math.exp %179 : vector<8x8xf32>
    %cst_46 = arith.constant dense<0.000000e+00> : vector<8xf32>
    %181 = vector.multi_reduction <add>, %180, %cst_46 [1] : vector<8x8xf32> to vector<8xf32>
    %182 = vector.shape_cast %181 : vector<8xf32> to vector<8x1xf32>
    %183 = tpu.reciprocal %182 {approx = true} : vector<8x1xf32> -> vector<8x1xf32>
    %184 = vector.broadcast %183 : vector<8x1xf32> to vector<8x8xf32>
    %185 = arith.mulf %180, %184 : vector<8x8xf32>
    %186 = vector.extract_strided_slice %75 {offsets = [8, 0], sizes = [8, 128], strides = [1, 1]} : vector<16x128xf32> to vector<8x128xf32>
    %cst_47 = arith.constant dense<0.000000e+00> : vector<8x128xf32>
    %187 = tpu.matmul %185, %186, %cst_47 {dimension_numbers = #tpu.dot_dimension_numbers<[1], [0], [0], [1], [0, 0, 1, 1], [], []>} : vector<8x8xf32>, vector<8x128xf32>, vector<8x128xf32> -> vector<8x128xf32>
    %188 = arith.addf %171, %187 : vector<8x128xf32>
    %189 = vector.extract_strided_slice %69 {offsets = [8, 0], sizes = [8, 128], strides = [1, 1]} : vector<16x128xf32> to vector<8x128xf32>
    %cst_48 = arith.constant dense<0.000000e+00> : vector<8x8xf32>
    %190 = tpu.matmul %189, %153, %cst_48 {dimension_numbers = #tpu.dot_dimension_numbers<[1], [1], [0], [0], [0, 0, 1, 0], [], []>} : vector<8x128xf32>, vector<8x128xf32>, vector<8x8xf32> -> vector<8x8xf32>
    %cst_49 = arith.constant -1.000000e+30 : f32
    %191 = vector.broadcast %cst_49 : f32 to vector<8x8xf32>
    %192 = arith.select %82, %190, %191 : vector<8x8xi1>, vector<8x8xf32>
    %cst_50 = arith.constant dense<0xFF800000> : vector<8xf32>
    %193 = vector.multi_reduction <maximumf>, %192, %cst_50 [1] : vector<8x8xf32> to vector<8xf32>
    %194 = vector.shape_cast %193 : vector<8xf32> to vector<8x1xf32>
    %195 = vector.broadcast %194 : vector<8x1xf32> to vector<8x8xf32>
    %196 = arith.subf %192, %195 : vector<8x8xf32>
    %197 = math.exp %196 : vector<8x8xf32>
    %cst_51 = arith.constant dense<0.000000e+00> : vector<8xf32>
    %198 = vector.multi_reduction <add>, %197, %cst_51 [1] : vector<8x8xf32> to vector<8xf32>
    %199 = vector.shape_cast %198 : vector<8xf32> to vector<8x1xf32>
    %200 = tpu.reciprocal %199 {approx = true} : vector<8x1xf32> -> vector<8x1xf32>
    %201 = vector.broadcast %200 : vector<8x1xf32> to vector<8x8xf32>
    %202 = arith.mulf %197, %201 : vector<8x8xf32>
    %203 = vector.extract_strided_slice %77 {offsets = [8, 0], sizes = [8, 128], strides = [1, 1]} : vector<16x128xf32> to vector<8x128xf32>
    %cst_52 = arith.constant dense<0.000000e+00> : vector<8x128xf32>
    %204 = tpu.matmul %202, %203, %cst_52 {dimension_numbers = #tpu.dot_dimension_numbers<[1], [0], [0], [1], [0, 0, 1, 1], [], []>} : vector<8x8xf32>, vector<8x128xf32>, vector<8x128xf32> -> vector<8x128xf32>
    %205 = arith.addf %188, %204 : vector<8x128xf32>
    %206 = vector.extract_strided_slice %71 {offsets = [8, 0], sizes = [8, 128], strides = [1, 1]} : vector<16x128xf32> to vector<8x128xf32>
    %cst_53 = arith.constant dense<0.000000e+00> : vector<8x8xf32>
    %207 = tpu.matmul %206, %153, %cst_53 {dimension_numbers = #tpu.dot_dimension_numbers<[1], [1], [0], [0], [0, 0, 1, 0], [], []>} : vector<8x128xf32>, vector<8x128xf32>, vector<8x8xf32> -> vector<8x8xf32>
    %cst_54 = arith.constant -1.000000e+30 : f32
    %208 = vector.broadcast %cst_54 : f32 to vector<8x8xf32>
    %209 = arith.select %82, %207, %208 : vector<8x8xi1>, vector<8x8xf32>
    %cst_55 = arith.constant dense<0xFF800000> : vector<8xf32>
    %210 = vector.multi_reduction <maximumf>, %209, %cst_55 [1] : vector<8x8xf32> to vector<8xf32>
    %211 = vector.shape_cast %210 : vector<8xf32> to vector<8x1xf32>
    %212 = vector.broadcast %211 : vector<8x1xf32> to vector<8x8xf32>
    %213 = arith.subf %209, %212 : vector<8x8xf32>
    %214 = math.exp %213 : vector<8x8xf32>
    %cst_56 = arith.constant dense<0.000000e+00> : vector<8xf32>
    %215 = vector.multi_reduction <add>, %214, %cst_56 [1] : vector<8x8xf32> to vector<8xf32>
    %216 = vector.shape_cast %215 : vector<8xf32> to vector<8x1xf32>
    %217 = tpu.reciprocal %216 {approx = true} : vector<8x1xf32> -> vector<8x1xf32>
    %218 = vector.broadcast %217 : vector<8x1xf32> to vector<8x8xf32>
    %219 = arith.mulf %214, %218 : vector<8x8xf32>
    %220 = vector.extract_strided_slice %79 {offsets = [8, 0], sizes = [8, 128], strides = [1, 1]} : vector<16x128xf32> to vector<8x128xf32>
    %cst_57 = arith.constant dense<0.000000e+00> : vector<8x128xf32>
    %221 = tpu.matmul %219, %220, %cst_57 {dimension_numbers = #tpu.dot_dimension_numbers<[1], [0], [0], [1], [0, 0, 1, 1], [], []>} : vector<8x8xf32>, vector<8x128xf32>, vector<8x128xf32> -> vector<8x128xf32>
    %222 = arith.addf %205, %221 : vector<8x128xf32>
    %223 = tpu.concatenate %152, %222 in 0 : vector<8x128xf32>, vector<8x128xf32> -> vector<16x128xf32>
    %c0_58 = arith.constant 0 : index
    %c0_59 = arith.constant 0 : index
    %224 = vector.load %arg3[%c0_58, %c0_59] : memref<128x128xf32, #tpu.memory_space<vmem>>, vector<128x128xf32>
    %cst_60 = arith.constant dense<0.000000e+00> : vector<16x128xf32>
    %225 = tpu.matmul %223, %224, %cst_60 {dimension_numbers = #tpu.dot_dimension_numbers<[1], [0], [0], [1], [0, 0, 1, 1], [], []>} : vector<16x128xf32>, vector<128x128xf32>, vector<16x128xf32> -> vector<16x128xf32>
    %c0_61 = arith.constant 0 : index
    %c0_62 = arith.constant 0 : index
    %226 = vector.load %arg4[%c0_61, %c0_62] : memref<1x128xf32, #tpu.memory_space<vmem>>, vector<1x128xf32>
    %227 = vector.broadcast %226 : vector<1x128xf32> to vector<16x128xf32>
    %228 = arith.addf %225, %227 : vector<16x128xf32>
    %229 = arith.addf %1, %228 : vector<16x128xf32>
    %c0_63 = arith.constant 0 : index
    %c0_64 = arith.constant 0 : index
    %230 = vector.load %arg7[%c0_63, %c0_64] : memref<1x128xf32, #tpu.memory_space<vmem>>, vector<1x128xf32>
    %c0_65 = arith.constant 0 : index
    %c0_66 = arith.constant 0 : index
    %231 = vector.load %arg8[%c0_65, %c0_66] : memref<1x128xf32, #tpu.memory_space<vmem>>, vector<1x128xf32>
    %cst_67 = arith.constant dense<0.000000e+00> : vector<16xf32>
    %232 = vector.multi_reduction <add>, %229, %cst_67 [1] : vector<16x128xf32> to vector<16xf32>
    %233 = vector.shape_cast %232 : vector<16xf32> to vector<16x1xf32>
    %cst_68 = arith.constant 0.00999999977 : f32
    %234 = vector.broadcast %cst_68 : f32 to vector<16x1xf32>
    %235 = arith.mulf %233, %234 : vector<16x1xf32>
    %236 = vector.broadcast %235 : vector<16x1xf32> to vector<16x128xf32>
    %237 = arith.subf %229, %236 : vector<16x128xf32>
    %238 = arith.mulf %237, %237 : vector<16x128xf32>
    %239 = vector.broadcast %6 : vector<1x128xf32> to vector<16x128xf32>
    %240 = arith.mulf %238, %239 : vector<16x128xf32>
    %cst_69 = arith.constant dense<0.000000e+00> : vector<16xf32>
    %241 = vector.multi_reduction <add>, %240, %cst_69 [1] : vector<16x128xf32> to vector<16xf32>
    %242 = vector.shape_cast %241 : vector<16xf32> to vector<16x1xf32>
    %cst_70 = arith.constant 0.00999999977 : f32
    %243 = vector.broadcast %cst_70 : f32 to vector<16x1xf32>
    %244 = arith.mulf %242, %243 : vector<16x1xf32>
    %cst_71 = arith.constant 9.99999974E-6 : f32
    %245 = vector.broadcast %cst_71 : f32 to vector<16x1xf32>
    %246 = arith.addf %244, %245 : vector<16x1xf32>
    %247 = math.rsqrt %246 : vector<16x1xf32>
    %248 = vector.broadcast %247 : vector<16x1xf32> to vector<16x128xf32>
    %249 = arith.mulf %237, %248 : vector<16x128xf32>
    %250 = vector.broadcast %230 : vector<1x128xf32> to vector<16x128xf32>
    %251 = arith.mulf %249, %250 : vector<16x128xf32>
    %252 = vector.broadcast %231 : vector<1x128xf32> to vector<16x128xf32>
    %253 = arith.addf %251, %252 : vector<16x128xf32>
    %c0_72 = arith.constant 0 : index
    %c0_73 = arith.constant 0 : index
    %254 = vector.load %arg9[%c0_72, %c0_73] : memref<128x512xf32, #tpu.memory_space<vmem>>, vector<128x512xf32>
    %cst_74 = arith.constant dense<0.000000e+00> : vector<16x512xf32>
    %255 = tpu.matmul %253, %254, %cst_74 {dimension_numbers = #tpu.dot_dimension_numbers<[1], [0], [0], [1], [0, 0, 1, 1], [], []>} : vector<16x128xf32>, vector<128x512xf32>, vector<16x512xf32> -> vector<16x512xf32>
    %c0_75 = arith.constant 0 : index
    %c0_76 = arith.constant 0 : index
    %256 = vector.load %arg10[%c0_75, %c0_76] : memref<1x512xf32, #tpu.memory_space<vmem>>, vector<1x512xf32>
    %257 = vector.broadcast %256 : vector<1x512xf32> to vector<16x512xf32>
    %258 = arith.addf %255, %257 : vector<16x512xf32>
    %cst_77 = arith.constant 0.000000e+00 : f32
    %259 = vector.broadcast %cst_77 : f32 to vector<16x512xf32>
    %260 = arith.maximumf %258, %259 : vector<16x512xf32>
    %c0_78 = arith.constant 0 : index
    %c0_79 = arith.constant 0 : index
    %261 = vector.load %arg11[%c0_78, %c0_79] : memref<512x128xf32, #tpu.memory_space<vmem>>, vector<512x128xf32>
    %cst_80 = arith.constant dense<0.000000e+00> : vector<16x128xf32>
    %262 = tpu.matmul %260, %261, %cst_80 {dimension_numbers = #tpu.dot_dimension_numbers<[1], [0], [0], [1], [0, 0, 1, 1], [], []>} : vector<16x512xf32>, vector<512x128xf32>, vector<16x128xf32> -> vector<16x128xf32>
    %c0_81 = arith.constant 0 : index
    %c0_82 = arith.constant 0 : index
    %263 = vector.load %arg12[%c0_81, %c0_82] : memref<1x128xf32, #tpu.memory_space<vmem>>, vector<1x128xf32>
    %264 = vector.broadcast %263 : vector<1x128xf32> to vector<16x128xf32>
    %265 = arith.addf %262, %264 : vector<16x128xf32>
    %266 = arith.addf %229, %265 : vector<16x128xf32>
    %267 = vector.shape_cast %266 : vector<16x128xf32> to vector<2x8x128xf32>
    %c0_83 = arith.constant 0 : index
    %c0_84 = arith.constant 0 : index
    %c0_85 = arith.constant 0 : index
    %268 = vector.load %arg13[%c0_83, %c0_84, %c0_85] : memref<2x8x128xf32, #tpu.memory_space<vmem>>, vector<2x8x128xf32>
    tpu.vector_store %arg13[%c0_83, %c0_84, %c0_85], %267 {strides = array<i32>} : memref<2x8x128xf32, #tpu.memory_space<vmem>>, vector<2x8x128xf32>,
    return
  }
  func.func @transform_0(%arg0: i32) -> (i32, i32, i32) {
    %c0_i32 = arith.constant 0 : i32
    %c0_i32_0 = arith.constant 0 : i32
    %c0_i32_1 = arith.constant 0 : i32
    return %arg0, %c0_i32, %c0_i32_0 : i32, i32, i32
  }
  func.func @transform_1(%arg0: i32) -> (i32, i32) {
    %c0_i32 = arith.constant 0 : i32
    %c0_i32_0 = arith.constant 0 : i32
    %c0_i32_1 = arith.constant 0 : i32
    return %c0_i32, %c0_i32_0 : i32, i32
  }
  func.func @transform_2(%arg0: i32) -> (i32, i32) {
    %c0_i32 = arith.constant 0 : i32
    %c0_i32_0 = arith.constant 0 : i32
    %c0_i32_1 = arith.constant 0 : i32
    return %c0_i32, %c0_i32_0 : i32, i32
  }
  func.func @transform_3(%arg0: i32) -> (i32, i32) {
    %c0_i32 = arith.constant 0 : i32
    %c0_i32_0 = arith.constant 0 : i32
    %c0_i32_1 = arith.constant 0 : i32
    return %c0_i32, %c0_i32_0 : i32, i32
  }
  func.func @transform_4(%arg0: i32) -> (i32, i32) {
    %c0_i32 = arith.constant 0 : i32
    %c0_i32_0 = arith.constant 0 : i32
    %c0_i32_1 = arith.constant 0 : i32
    return %c0_i32, %c0_i32_0 : i32, i32
  }
  func.func @transform_5(%arg0: i32) -> (i32, i32) {
    %c0_i32 = arith.constant 0 : i32
    %c0_i32_0 = arith.constant 0 : i32
    %c0_i32_1 = arith.constant 0 : i32
    return %c0_i32, %c0_i32_0 : i32, i32
  }
  func.func @transform_6(%arg0: i32) -> (i32, i32) {
    %c0_i32 = arith.constant 0 : i32
    %c0_i32_0 = arith.constant 0 : i32
    %c0_i32_1 = arith.constant 0 : i32
    return %c0_i32, %c0_i32_0 : i32, i32
  }
  func.func @transform_7(%arg0: i32) -> (i32, i32) {
    %c0_i32 = arith.constant 0 : i32
    %c0_i32_0 = arith.constant 0 : i32
    %c0_i32_1 = arith.constant 0 : i32
    return %c0_i32, %c0_i32_0 : i32, i32
  }
  func.func @transform_8(%arg0: i32) -> (i32, i32) {
    %c0_i32 = arith.constant 0 : i32
    %c0_i32_0 = arith.constant 0 : i32
    %c0_i32_1 = arith.constant 0 : i32
    return %c0_i32, %c0_i32_0 : i32, i32
  }
  func.func @transform_9(%arg0: i32) -> (i32, i32) {
    %c0_i32 = arith.constant 0 : i32
    %c0_i32_0 = arith.constant 0 : i32
    %c0_i32_1 = arith.constant 0 : i32
    return %c0_i32, %c0_i32_0 : i32, i32
  }
  func.func @transform_10(%arg0: i32) -> (i32, i32) {
    %c0_i32 = arith.constant 0 : i32
    %c0_i32_0 = arith.constant 0 : i32
    %c0_i32_1 = arith.constant 0 : i32
    return %c0_i32, %c0_i32_0 : i32, i32
  }
  func.func @transform_11(%arg0: i32) -> (i32, i32) {
    %c0_i32 = arith.constant 0 : i32
    %c0_i32_0 = arith.constant 0 : i32
    %c0_i32_1 = arith.constant 0 : i32
    return %c0_i32, %c0_i32_0 : i32, i32
  }
  func.func @transform_12(%arg0: i32) -> (i32, i32, i32) {
    %c0_i32 = arith.constant 0 : i32
    %c0_i32_0 = arith.constant 0 : i32
    %c0_i32_1 = arith.constant 0 : i32
    return %arg0, %c0_i32, %c0_i32_0 : i32, i32, i32
  }
}

</mosaic_0001>

<llo_original>
// kernel: block_forward.1
$region0: #{block_forward.1}
  #allocation0 [shape = 'u32[]', space=smem, size = 0x4, offset = 0x4, fixed_abs, tag = 'smem constant byte address 0x4 - core index']
  #allocation1 [shape = 'u32[72,128]{1,0:T(1,128)}', space=vmem, size = 0x9000, scoped, tag = 'internal scratch']
  %s0 = inlined_call_operand.vmem [shape: f32[2,8,128], index: 0, kind: input, shape index: {}]
  %s1 = inlined_call_operand.vmem [shape: f32[128,384], index: 1, kind: input, shape index: {}]
  %s2 = inlined_call_operand.vmem [shape: f32[128,128], index: 2, kind: input, shape index: {}]
  %s3 = inlined_call_operand.vmem [shape: f32[1,128], index: 3, kind: input, shape index: {}]
  %s4 = inlined_call_operand.vmem [shape: f32[1,128], index: 4, kind: input, shape index: {}]
  %s5 = inlined_call_operand.vmem [shape: f32[1,128], index: 5, kind: input, shape index: {}]
  %s6 = inlined_call_operand.vmem [shape: f32[1,128], index: 6, kind: input, shape index: {}]
  %s7 = inlined_call_operand.vmem [shape: f32[1,128], index: 7, kind: input, shape index: {}]
  %s8 = inlined_call_operand.vmem [shape: f32[128,512], index: 8, kind: input, shape index: {}]
  %s9 = inlined_call_operand.vmem [shape: f32[1,512], index: 9, kind: input, shape index: {}]
  %s10 = inlined_call_operand.vmem [shape: f32[512,128], index: 10, kind: input, shape index: {}]
  %s11 = inlined_call_operand.vmem [shape: f32[1,128], index: 11, kind: input, shape index: {}]
  %s12 = inlined_call_operand.hbm [shape: f32[2,8,128], index: 12, kind: output, shape index: {}]
  %s13 = sld [smem:[#allocation0]]
  $region58: #{block_forward.1} parent=0
    _
  %s15 = ssub.s32 1, %s13
  %s16 = scalar_select 0, %s15, %s13
  $region1: #{block_forward.1} parent=0
    #allocation2 [shape = 'u8[8192]{0}', space=vmem, size = 0x2000, scoped, tag = 'output window, operand 0, single buffered']
    #allocation3 [shape = 's32[1]{0}', space=sflag, size = 0x4, scoped, tag = 'scoped memory for block_forward.1']
    %17 = vsyncpa [#allocation3], 0
    // Predicated region
    $region2: #{block_forward.1} parent=1 // pred_check
      _
    $region3: #{block_forward.1} parent=1 // pred_check_branch
      %19 = sbr.rel (0) target = $region5
    $region4: #{block_forward.1} parent=1 // pred_region
      _
    $region5: #{block_forward.1} parent=1 // pred_fallthru
      _
    // Predicated region
    $region6: #{block_forward.1} parent=1 // pred_check
      _
    $region7: #{block_forward.1} parent=1 // pred_check_branch
      %21 = sbr.rel (0) target = $region9
    $region8: #{block_forward.1} parent=1 // pred_region
      _
    $region9: #{block_forward.1} parent=1 // pred_fallthru
      _
    // Predicated region
    $region10: #{block_forward.1} parent=1 // pred_check
      _
    $region11: #{block_forward.1} parent=1 // pred_check_branch
      %23 = sbr.rel (0) target = $region13
    $region12: #{block_forward.1} parent=1 // pred_region
      _
    $region13: #{block_forward.1} parent=1 // pred_fallthru
      _
    // Predicated region
    $region14: #{block_forward.1} parent=1 // pred_check
      _
    $region15: #{block_forward.1} parent=1 // pred_check_branch
      %25 = sbr.rel (0) target = $region17
    $region16: #{block_forward.1} parent=1 // pred_region
      _
    $region17: #{block_forward.1} parent=1 // pred_fallthru
      _
    // Predicated region
    $region18: #{block_forward.1} parent=1 // pred_check
      _
    $region19: #{block_forward.1} parent=1 // pred_check_branch
      %27 = sbr.rel (0) target = $region21
    $region20: #{block_forward.1} parent=1 // pred_region
      _
    $region21: #{block_forward.1} parent=1 // pred_fallthru
      _
    // Predicated region
    $region22: #{block_forward.1} parent=1 // pred_check
      _
    $region23: #{block_forward.1} parent=1 // pred_check_branch
      %29 = sbr.rel (0) target = $region25
    $region24: #{block_forward.1} parent=1 // pred_region
      _
    $region25: #{block_forward.1} parent=1 // pred_fallthru
      _
    // Predicated region
    $region26: #{block_forward.1} parent=1 // pred_check
      _
    $region27: #{block_forward.1} parent=1 // pred_check_branch
      %31 = sbr.rel (0) target = $region29
    $region28: #{block_forward.1} parent=1 // pred_region
      _
    $region29: #{block_forward.1} parent=1 // pred_fallthru
      _
    // Predicated region
    $region30: #{block_forward.1} parent=1 // pred_check
      _
    $region31: #{block_forward.1} parent=1 // pred_check_branch
      %33 = sbr.rel (0) target = $region33
    $region32: #{block_forward.1} parent=1 // pred_region
      _
    $region33: #{block_forward.1} parent=1 // pred_fallthru
      _
    // Predicated region
    $region34: #{block_forward.1} parent=1 // pred_check
      _
    $region35: #{block_forward.1} parent=1 // pred_check_branch
      %35 = sbr.rel (0) target = $region37
    $region36: #{block_forward.1} parent=1 // pred_region
      _
    $region37: #{block_forward.1} parent=1 // pred_fallthru
      _
    // Predicated region
    $region38: #{block_forward.1} parent=1 // pred_check
      _
    $region39: #{block_forward.1} parent=1 // pred_check_branch
      %37 = sbr.rel (0) target = $region41
    $region40: #{block_forward.1} parent=1 // pred_region
      _
    $region41: #{block_forward.1} parent=1 // pred_fallthru
      _
    // Predicated region
    $region42: #{block_forward.1} parent=1 // pred_check
      _
    $region43: #{block_forward.1} parent=1 // pred_check_branch
      %39 = sbr.rel (0) target = $region45
    $region44: #{block_forward.1} parent=1 // pred_region
      _
    $region45: #{block_forward.1} parent=1 // pred_fallthru
      _
    // Predicated region
    $region46: #{block_forward.1} parent=1 // pred_check
      _
    $region47: #{block_forward.1} parent=1 // pred_check_branch
      %41 = sbr.rel (0) target = $region49
    $region48: #{block_forward.1} parent=1 // pred_region
      _
    $region49: #{block_forward.1} parent=1 // pred_fallthru
      _
    %v42 = vld [vmem:[%s0] sm:$0xff]
    %v43 = vld [vmem:[%s0 + $0x8] sm:$0xff]
    %v44 = vlaneseq
    %v45 = vand.u32 %v44, 127
    %vm46 = vcmp.lt.s32.totalorder %v45, 100
    %v47 = vsel %vm46, 1, 0
    %v48 = vcvt.s32.f32 %v47
    %v49 = vld [vmem:[%s4] sm:$0x1]
    %v50 = vld [vmem:[%s5] sm:$0x1]
    %51 = vadd.xlane.f32.xlu0 %v42
    %v52 = vpop.xlane.xlu0 %51
    %53 = vadd.xlane.f32.xlu0 %v43
    %v54 = vpop.xlane.xlu0 %53
    %v55 = vmul.f32 %v52, 0.01
    %v56 = vmul.f32 %v54, 0.01
    %v57 = vsub.f32 %v42, %v55
    %v58 = vsub.f32 %v43, %v56
    %v59 = vmul.f32 %v57, %v57
    %v60 = vmul.f32 %v58, %v58
    %v61 = vmul.f32 %v59, %v48
    %v62 = vmul.f32 %v60, %v48
    %63 = vadd.xlane.f32.xlu0 %v61
    %v64 = vpop.xlane.xlu0 %63
    %65 = vadd.xlane.f32.xlu0 %v62
    %v66 = vpop.xlane.xlu0 %65
    %v67 = vmul.f32 %v64, 0.01
    %v68 = vmul.f32 %v66, 0.01
    %v69 = vadd.f32 %v67, 1e-05
    %v70 = vadd.f32 %v68, 1e-05
    %v71 = vrsqrt.pop %v69
    %v72 = vmul.f32 %v71, %v69
    %v73 = vmul.f32 %v72, %v71
    %v74 = vmul.f32 0.5, %v73
    %v75 = vsub.f32 1.5, %v74
    %v76 = vmul.f32 %v71, %v75
    %vm77 = vweird.f32 %v69
    %vm78 = vweird.f32 %v71
    %vm79 = vmor %vm77, %vm78
    %v80 = vsel %vm79, %v71, %v76
    %v81 = vrsqrt.pop %v70
    %v82 = vmul.f32 %v81, %v70
    %v83 = vmul.f32 %v82, %v81
    %v84 = vmul.f32 0.5, %v83
    %v85 = vsub.f32 1.5, %v84
    %v86 = vmul.f32 %v81, %v85
    %vm87 = vweird.f32 %v70
    %vm88 = vweird.f32 %v81
    %vm89 = vmor %vm87, %vm88
    %v90 = vsel %vm89, %v81, %v86
    %v91 = vmul.f32 %v57, %v80
    %v92 = vmul.f32 %v58, %v90
    %v94 = vperm.slane %v49, 0
    %v96 = vmul.f32 %v91, %v94
    %v97 = vmul.f32 %v92, %v94
    %v99 = vperm.slane %v50, 0
    %v101 = vadd.f32 %v96, %v99
    %v102 = vadd.f32 %v97, %v99
    %v103 = vld [vmem:[%s1] sm:$0xff]
    %v104 = vld [vmem:[%s1 + $0x8] sm:$0xff]
    %v105 = vld [vmem:[%s1 + $0x10] sm:$0xff]
    %v106 = vld [vmem:[%s1 + $0x18] sm:$0xff]
    %v107 = vld [vmem:[%s1 + $0x20] sm:$0xff]
    %v108 = vld [vmem:[%s1 + $0x28] sm:$0xff]
    %v109 = vld [vmem:[%s1 + $0x30] sm:$0xff]
    %v110 = vld [vmem:[%s1 + $0x38] sm:$0xff]
    %v111 = vld [vmem:[%s1 + $0x40] sm:$0xff]
    %v112 = vld [vmem:[%s1 + $0x48] sm:$0xff]
    %v113 = vld [vmem:[%s1 + $0x50] sm:$0xff]
    %v114 = vld [vmem:[%s1 + $0x58] sm:$0xff]
    %v115 = vld [vmem:[%s1 + $0x60] sm:$0xff]
    %v116 = vld [vmem:[%s1 + $0x68] sm:$0xff]
    %v117 = vld [vmem:[%s1 + $0x70] sm:$0xff]
    %v118 = vld [vmem:[%s1 + $0x78] sm:$0xff]
    %v119 = vld [vmem:[%s1 + $0x80] sm:$0xff]
    %v120 = vld [vmem:[%s1 + $0x88] sm:$0xff]
    %v121 = vld [vmem:[%s1 + $0x90] sm:$0xff]
    %v122 = vld [vmem:[%s1 + $0x98] sm:$0xff]
    %v123 = vld [vmem:[%s1 + $0xa0] sm:$0xff]
    %v124 = vld [vmem:[%s1 + $0xa8] sm:$0xff]
    %v125 = vld [vmem:[%s1 + $0xb0] sm:$0xff]
    %v126 = vld [vmem:[%s1 + $0xb8] sm:$0xff]
    %v127 = vld [vmem:[%s1 + $0xc0] sm:$0xff]
    %v128 = vld [vmem:[%s1 + $0xc8] sm:$0xff]
    %v129 = vld [vmem:[%s1 + $0xd0] sm:$0xff]
    %v130 = vld [vmem:[%s1 + $0xd8] sm:$0xff]
    %v131 = vld [vmem:[%s1 + $0xe0] sm:$0xff]
    %v132 = vld [vmem:[%s1 + $0xe8] sm:$0xff]
    %v133 = vld [vmem:[%s1 + $0xf0] sm:$0xff]
    %v134 = vld [vmem:[%s1 + $0xf8] sm:$0xff]
    %v135 = vld [vmem:[%s1 + $0x100] sm:$0xff]
    %v136 = vld [vmem:[%s1 + $0x108] sm:$0xff]
    %v137 = vld [vmem:[%s1 + $0x110] sm:$0xff]
    %v138 = vld [vmem:[%s1 + $0x118] sm:$0xff]
    %v139 = vld [vmem:[%s1 + $0x120] sm:$0xff]
    %v140 = vld [vmem:[%s1 + $0x128] sm:$0xff]
    %v141 = vld [vmem:[%s1 + $0x130] sm:$0xff]
    %v142 = vld [vmem:[%s1 + $0x138] sm:$0xff]
    %v143 = vld [vmem:[%s1 + $0x140] sm:$0xff]
    %v144 = vld [vmem:[%s1 + $0x148] sm:$0xff]
    %v145 = vld [vmem:[%s1 + $0x150] sm:$0xff]
    %v146 = vld [vmem:[%s1 + $0x158] sm:$0xff]
    %v147 = vld [vmem:[%s1 + $0x160] sm:$0xff]
    %v148 = vld [vmem:[%s1 + $0x168] sm:$0xff]
    %v149 = vld [vmem:[%s1 + $0x170] sm:$0xff]
    %v150 = vld [vmem:[%s1 + $0x178] sm:$0xff]
    %151 = vmatpush.msra.mxu0 %v148
    %152 = vmatpush.msra.mxu0 %v145
    %153 = vmatpush.msra.mxu0 %v142
    %154 = vmatpush.msra.mxu0 %v139
    %155 = vmatpush.msra.mxu0 %v136
    %156 = vmatpush.msra.mxu0 %v133
    %157 = vmatpush.msra.mxu0 %v130
    %158 = vmatpush.msra.mxu0 %v127
    %159 = vmatpush.msra.mxu0 %v124
    %160 = vmatpush.msra.mxu0 %v121
    %161 = vmatpush.msra.mxu0 %v118
    %162 = vmatpush.msra.mxu0 %v115
    %163 = vmatpush.msra.mxu0 %v112
    %164 = vmatpush.msra.mxu0 %v109
    %165 = vmatpush.msra.mxu0 %v106
    %166 = vmatpush.msra.mxu0 %v103
    %167 = vmatmul.f32.gmra.mxu0 %v101
    %v168 = vpop.f32.mrf.mxu0
    %v169 = vadd.f32 0.0, %v168
    %170 = vmatmul.f32.gmra.mxu0 %v102
    %v171 = vpop.f32.mrf.mxu0
    %v172 = vadd.f32 0.0, %v171
    %173 = vdwg.mxu0
    %174 = vmatpush.msra.mxu0 %v149
    %175 = vmatpush.msra.mxu0 %v146
    %176 = vmatpush.msra.mxu0 %v143
    %177 = vmatpush.msra.mxu0 %v140
    %178 = vmatpush.msra.mxu0 %v137
    %179 = vmatpush.msra.mxu0 %v134
    %180 = vmatpush.msra.mxu0 %v131
    %181 = vmatpush.msra.mxu0 %v128
    %182 = vmatpush.msra.mxu0 %v125
    %183 = vmatpush.msra.mxu0 %v122
    %184 = vmatpush.msra.mxu0 %v119
    %185 = vmatpush.msra.mxu0 %v116
    %186 = vmatpush.msra.mxu0 %v113
    %187 = vmatpush.msra.mxu0 %v110
    %188 = vmatpush.msra.mxu0 %v107
    %189 = vmatpush.msra.mxu0 %v104
    %190 = vmatmul.f32.gmra.mxu0 %v101
    %v191 = vpop.f32.mrf.mxu0
    %v192 = vadd.f32 0.0, %v191
    %193 = vmatmul.f32.gmra.mxu0 %v102
    %v194 = vpop.f32.mrf.mxu0
    %v195 = vadd.f32 0.0, %v194
    %196 = vdwg.mxu0
    %197 = vmatpush.msra.mxu0 %v150
    %198 = vmatpush.msra.mxu0 %v147
    %199 = vmatpush.msra.mxu0 %v144
    %200 = vmatpush.msra.mxu0 %v141
    %201 = vmatpush.msra.mxu0 %v138
    %202 = vmatpush.msra.mxu0 %v135
    %203 = vmatpush.msra.mxu0 %v132
    %204 = vmatpush.msra.mxu0 %v129
    %205 = vmatpush.msra.mxu0 %v126
    %206 = vmatpush.msra.mxu0 %v123
    %207 = vmatpush.msra.mxu0 %v120
    %208 = vmatpush.msra.mxu0 %v117
    %209 = vmatpush.msra.mxu0 %v114
    %210 = vmatpush.msra.mxu0 %v111
    %211 = vmatpush.msra.mxu0 %v108
    %212 = vmatpush.msra.mxu0 %v105
    %213 = vmatmul.f32.gmra.mxu0 %v101
    %v214 = vpop.f32.mrf.mxu0
    %v215 = vadd.f32 0.0, %v214
    %216 = vmatmul.f32.gmra.mxu0 %v102
    %v217 = vpop.f32.mrf.mxu0
    %v218 = vadd.f32 0.0, %v217
    %219 = vdwg.mxu0
    %vm220 = vcmp.ge.s32.totalorder %v45, 0
    %vm221 = vcmp.lt.s32.totalorder %v45, 32
    %vm222 = vmand %vm220, %vm221
    %v223 = vsel %vm222, 1, 0
    %v224 = vcvt.s32.f32 %v223
    %vm225 = vcmp.ge.s32.totalorder %v45, 32
    %vm226 = vcmp.lt.s32.totalorder %v45, 64
    %vm227 = vmand %vm225, %vm226
    %v228 = vsel %vm227, 1, 0
    %v229 = vcvt.s32.f32 %v228
    %vm230 = vcmp.ge.s32.totalorder %v45, 64
    %vm231 = vcmp.lt.s32.totalorder %v45, 96
    %vm232 = vmand %vm230, %vm231
    %v233 = vsel %vm232, 1, 0
    %v234 = vcvt.s32.f32 %v233
    %vm235 = vcmp.ge.s32.totalorder %v45, 96
    %vm236 = vcmp.lt.s32.totalorder %v45, 128
    %vm237 = vmand %vm235, %vm236
    %v238 = vsel %vm237, 1, 0
    %v239 = vcvt.s32.f32 %v238
    %v240 = vmul.f32 %v169, %v224
    %v241 = vmul.f32 %v172, %v224
    %v242 = vmul.f32 %v169, %v229
    %v243 = vmul.f32 %v172, %v229
    %v244 = vmul.f32 %v169, %v234
    %v245 = vmul.f32 %v172, %v234
    %v246 = vmul.f32 %v169, %v239
    %v247 = vmul.f32 %v172, %v239
    %v248 = vmul.f32 %v215, %v224
    %v249 = vmul.f32 %v218, %v224
    %v250 = vmul.f32 %v215, %v229
    %v251 = vmul.f32 %v218, %v229
    %v252 = vmul.f32 %v215, %v234
    %v253 = vmul.f32 %v218, %v234
    %v254 = vmul.f32 %v215, %v239
    %v255 = vmul.f32 %v218, %v239
    %v256 = vlaneseq
    %v257 = vshrl.u32 %v256, 7
    %vm258 = vcmp.ge.s32.totalorder %v257, %v45
    %259 = vmatpush.xpose.msra.mxu0 0.0
    %260 = vmatpush.xpose.msra.mxu0 0.0
    %261 = vmatpush.xpose.msra.mxu0 0.0
    %262 = vmatpush.xpose.msra.mxu0 0.0
    %263 = vmatpush.xpose.msra.mxu0 0.0
    %264 = vmatpush.xpose.msra.mxu0 0.0
    %265 = vmatpush.xpose.msra.mxu0 0.0
    %266 = vmatpush.xpose.msra.mxu0 0.0
    %267 = vmatpush.xpose.msra.mxu0 0.0
    %268 = vmatpush.xpose.msra.mxu0 0.0
    %269 = vmatpush.xpose.msra.mxu0 0.0
    %270 = vmatpush.xpose.msra.mxu0 0.0
    %271 = vmatpush.xpose.msra.mxu0 0.0
    %272 = vmatpush.xpose.msra.mxu0 0.0
    %273 = vmatpush.xpose.msra.mxu0 0.0
    %274 = vmatpush.xpose.msra.mxu0 %v192
    %275 = vmatmul.f32.gmra.mxu0 %v240
    %v276 = vpop.f32.mrf.mxu0
    %v277 = vadd.f32 0.0, %v276
    %278 = vdwg.mxu0
    %v279 = vsel %vm258, %v277, -1e+30
    %vm280 = vcmask 64512
    %v281 = vsel %vm280, %v279, -inf
    %282 = vmax.xlane.f32.xlu0 %v281
    %v283 = vpop.xlane.xlu0 %282
    %v284 = vsub.f32 %v279, %v283
    %v285 = vmul.f32 %v284, 1.442695
    %v286 = vpow.pop %v285
    %v287 = vsel %vm280, %v286, 0.0
    %288 = vadd.xlane.f32.xlu0 %v287
    %v289 = vpop.xlane.xlu0 %288
    %v290 = vrcp.pop %v289
    %v291 = vmul.f32 %v286, %v290
    %292 = vmatpush.xpose.msra.mxu0 0.0
    %293 = vmatpush.xpose.msra.mxu0 0.0
    %294 = vmatpush.xpose.msra.mxu0 0.0
    %295 = vmatpush.xpose.msra.mxu0 0.0
    %296 = vmatpush.xpose.msra.mxu0 0.0
    %297 = vmatpush.xpose.msra.mxu0 0.0
    %298 = vmatpush.xpose.msra.mxu0 0.0
    %299 = vmatpush.xpose.msra.mxu0 0.0
    %300 = vmatpush.xpose.msra.mxu0 0.0
    %301 = vmatpush.xpose.msra.mxu0 0.0
    %302 = vmatpush.xpose.msra.mxu0 0.0
    %303 = vmatpush.xpose.msra.mxu0 0.0
    %304 = vmatpush.xpose.msra.mxu0 0.0
    %305 = vmatpush.xpose.msra.mxu0 0.0
    %306 = vmatpush.xpose.msra.mxu0 0.0
    %307 = vmatpush.xpose.msra.mxu0 %v192
    %308 = vmatmul.f32.gmra.mxu0 %v242
    %v309 = vpop.f32.mrf.mxu0
    %v310 = vadd.f32 0.0, %v309
    %311 = vdwg.mxu0
    %v312 = vsel %vm258, %v310, -1e+30
    %v313 = vsel %vm280, %v312, -inf
    %314 = vmax.xlane.f32.xlu0 %v313
    %v315 = vpop.xlane.xlu0 %314
    %v316 = vsub.f32 %v312, %v315
    %v317 = vmul.f32 %v316, 1.442695
    %v318 = vpow.pop %v317
    %v319 = vsel %vm280, %v318, 0.0
    %320 = vadd.xlane.f32.xlu0 %v319
    %v321 = vpop.xlane.xlu0 %320
    %v322 = vrcp.pop %v321
    %v323 = vmul.f32 %v318, %v322
    %v325 = vsel %vm280, %v323, 0
    %327 = vmatpush.msra.mxu0 0.0
    %328 = vmatpush.msra.mxu0 0.0
    %329 = vmatpush.msra.mxu0 0.0
    %330 = vmatpush.msra.mxu0 0.0
    %331 = vmatpush.msra.mxu0 0.0
    %332 = vmatpush.msra.mxu0 0.0
    %333 = vmatpush.msra.mxu0 0.0
    %334 = vmatpush.msra.mxu0 0.0
    %335 = vmatpush.msra.mxu0 0.0
    %336 = vmatpush.msra.mxu0 0.0
    %337 = vmatpush.msra.mxu0 0.0
    %338 = vmatpush.msra.mxu0 0.0
    %339 = vmatpush.msra.mxu0 0.0
    %340 = vmatpush.msra.mxu0 0.0
    %341 = vmatpush.msra.mxu0 0.0
    %342 = vmatpush.msra.mxu0 %v250
    %343 = vmatmul.f32.gmra.mxu0 %v325
    %v344 = vpop.f32.mrf.mxu0
    %v345 = vadd.f32 0.0, %v344
    %346 = vdwg.mxu0
    %v348 = vsel %vm280, %v291, 0
    %350 = vmatpush.msra.mxu0 0.0
    %351 = vmatpush.msra.mxu0 0.0
    %352 = vmatpush.msra.mxu0 0.0
    %353 = vmatpush.msra.mxu0 0.0
    %354 = vmatpush.msra.mxu0 0.0
    %355 = vmatpush.msra.mxu0 0.0
    %356 = vmatpush.msra.mxu0 0.0
    %357 = vmatpush.msra.mxu0 0.0
    %358 = vmatpush.msra.mxu0 0.0
    %359 = vmatpush.msra.mxu0 0.0
    %360 = vmatpush.msra.mxu0 0.0
    %361 = vmatpush.msra.mxu0 0.0
    %362 = vmatpush.msra.mxu0 0.0
    %363 = vmatpush.msra.mxu0 0.0
    %364 = vmatpush.msra.mxu0 0.0
    %365 = vmatpush.msra.mxu0 %v248
    %366 = vmatmul.f32.gmra.mxu0 %v348
    %v367 = vpop.f32.mrf.mxu0
    %v368 = vadd.f32 %v345, %v367
    %369 = vdwg.mxu0
    %370 = vmatpush.xpose.msra.mxu0 0.0
    %371 = vmatpush.xpose.msra.mxu0 0.0
    %372 = vmatpush.xpose.msra.mxu0 0.0
    %373 = vmatpush.xpose.msra.mxu0 0.0
    %374 = vmatpush.xpose.msra.mxu0 0.0
    %375 = vmatpush.xpose.msra.mxu0 0.0
    %376 = vmatpush.xpose.msra.mxu0 0.0
    %377 = vmatpush.xpose.msra.mxu0 0.0
    %378 = vmatpush.xpose.msra.mxu0 0.0
    %379 = vmatpush.xpose.msra.mxu0 0.0
    %380 = vmatpush.xpose.msra.mxu0 0.0
    %381 = vmatpush.xpose.msra.mxu0 0.0
    %382 = vmatpush.xpose.msra.mxu0 0.0
    %383 = vmatpush.xpose.msra.mxu0 0.0
    %384 = vmatpush.xpose.msra.mxu0 0.0
    %385 = vmatpush.xpose.msra.mxu0 %v192
    %386 = vmatmul.f32.gmra.mxu0 %v244
    %v387 = vpop.f32.mrf.mxu0
    %v388 = vadd.f32 0.0, %v387
    %389 = vdwg.mxu0
    %v390 = vsel %vm258, %v388, -1e+30
    %v391 = vsel %vm280, %v390, -inf
    %392 = vmax.xlane.f32.xlu0 %v391
    %v393 = vpop.xlane.xlu0 %392
    %v394 = vsub.f32 %v390, %v393
    %v395 = vmul.f32 %v394, 1.442695
    %v396 = vpow.pop %v395
    %v397 = vsel %vm280, %v396, 0.0
    %398 = vadd.xlane.f32.xlu0 %v397
    %v399 = vpop.xlane.xlu0 %398
    %v400 = vrcp.pop %v399
    %v401 = vmul.f32 %v396, %v400
    %v403 = vsel %vm280, %v401, 0
    %405 = vmatpush.msra.mxu0 0.0
    %406 = vmatpush.msra.mxu0 0.0
    %407 = vmatpush.msra.mxu0 0.0
    %408 = vmatpush.msra.mxu0 0.0
    %409 = vmatpush.msra.mxu0 0.0
    %410 = vmatpush.msra.mxu0 0.0
    %411 = vmatpush.msra.mxu0 0.0
    %412 = vmatpush.msra.mxu0 0.0
    %413 = vmatpush.msra.mxu0 0.0
    %414 = vmatpush.msra.mxu0 0.0
    %415 = vmatpush.msra.mxu0 0.0
    %416 = vmatpush.msra.mxu0 0.0
    %417 = vmatpush.msra.mxu0 0.0
    %418 = vmatpush.msra.mxu0 0.0
    %419 = vmatpush.msra.mxu0 0.0
    %420 = vmatpush.msra.mxu0 %v252
    %421 = vmatmul.f32.gmra.mxu0 %v403
    %v422 = vpop.f32.mrf.mxu0
    %v423 = vadd.f32 0.0, %v422
    %424 = vdwg.mxu0
    %v425 = vadd.f32 %v368, %v423
    %426 = vmatpush.xpose.msra.mxu0 0.0
    %427 = vmatpush.xpose.msra.mxu0 0.0
    %428 = vmatpush.xpose.msra.mxu0 0.0
    %429 = vmatpush.xpose.msra.mxu0 0.0
    %430 = vmatpush.xpose.msra.mxu0 0.0
    %431 = vmatpush.xpose.msra.mxu0 0.0
    %432 = vmatpush.xpose.msra.mxu0 0.0
    %433 = vmatpush.xpose.msra.mxu0 0.0
    %434 = vmatpush.xpose.msra.mxu0 0.0
    %435 = vmatpush.xpose.msra.mxu0 0.0
    %436 = vmatpush.xpose.msra.mxu0 0.0
    %437 = vmatpush.xpose.msra.mxu0 0.0
    %438 = vmatpush.xpose.msra.mxu0 0.0
    %439 = vmatpush.xpose.msra.mxu0 0.0
    %440 = vmatpush.xpose.msra.mxu0 0.0
    %441 = vmatpush.xpose.msra.mxu0 %v192
    %442 = vmatmul.f32.gmra.mxu0 %v246
    %v443 = vpop.f32.mrf.mxu0
    %v444 = vadd.f32 0.0, %v443
    %445 = vdwg.mxu0
    %v446 = vsel %vm258, %v444, -1e+30
    %v447 = vsel %vm280, %v446, -inf
    %448 = vmax.xlane.f32.xlu0 %v447
    %v449 = vpop.xlane.xlu0 %448
    %v450 = vsub.f32 %v446, %v449
    %v451 = vmul.f32 %v450, 1.442695
    %v452 = vpow.pop %v451
    %v453 = vsel %vm280, %v452, 0.0
    %454 = vadd.xlane.f32.xlu0 %v453
    %v455 = vpop.xlane.xlu0 %454
    %v456 = vrcp.pop %v455
    %v457 = vmul.f32 %v452, %v456
    %v459 = vsel %vm280, %v457, 0
    %461 = vmatpush.msra.mxu0 0.0
    %462 = vmatpush.msra.mxu0 0.0
    %463 = vmatpush.msra.mxu0 0.0
    %464 = vmatpush.msra.mxu0 0.0
    %465 = vmatpush.msra.mxu0 0.0
    %466 = vmatpush.msra.mxu0 0.0
    %467 = vmatpush.msra.mxu0 0.0
    %468 = vmatpush.msra.mxu0 0.0
    %469 = vmatpush.msra.mxu0 0.0
    %470 = vmatpush.msra.mxu0 0.0
    %471 = vmatpush.msra.mxu0 0.0
    %472 = vmatpush.msra.mxu0 0.0
    %473 = vmatpush.msra.mxu0 0.0
    %474 = vmatpush.msra.mxu0 0.0
    %475 = vmatpush.msra.mxu0 0.0
    %476 = vmatpush.msra.mxu0 %v254
    %477 = vmatmul.f32.gmra.mxu0 %v459
    %v478 = vpop.f32.mrf.mxu0
    %v479 = vadd.f32 0.0, %v478
    %480 = vdwg.mxu0
    %v481 = vadd.f32 %v425, %v479
    %482 = vmatpush.xpose.msra.mxu0 0.0
    %483 = vmatpush.xpose.msra.mxu0 0.0
    %484 = vmatpush.xpose.msra.mxu0 0.0
    %485 = vmatpush.xpose.msra.mxu0 0.0
    %486 = vmatpush.xpose.msra.mxu0 0.0
    %487 = vmatpush.xpose.msra.mxu0 0.0
    %488 = vmatpush.xpose.msra.mxu0 0.0
    %489 = vmatpush.xpose.msra.mxu0 0.0
    %490 = vmatpush.xpose.msra.mxu0 0.0
    %491 = vmatpush.xpose.msra.mxu0 0.0
    %492 = vmatpush.xpose.msra.mxu0 0.0
    %493 = vmatpush.xpose.msra.mxu0 0.0
    %494 = vmatpush.xpose.msra.mxu0 0.0
    %495 = vmatpush.xpose.msra.mxu0 0.0
    %496 = vmatpush.xpose.msra.mxu0 0.0
    %497 = vmatpush.xpose.msra.mxu0 %v195
    %498 = vmatmul.f32.gmra.mxu0 %v241
    %v499 = vpop.f32.mrf.mxu0
    %v500 = vadd.f32 0.0, %v499
    %501 = vdwg.mxu0
    %v502 = vsel %vm258, %v500, -1e+30
    %v503 = vsel %vm280, %v502, -inf
    %504 = vmax.xlane.f32.xlu0 %v503
    %v505 = vpop.xlane.xlu0 %504
    %v506 = vsub.f32 %v502, %v505
    %v507 = vmul.f32 %v506, 1.442695
    %v508 = vpow.pop %v507
    %v509 = vsel %vm280, %v508, 0.0
    %510 = vadd.xlane.f32.xlu0 %v509
    %v511 = vpop.xlane.xlu0 %510
    %v512 = vrcp.pop %v511
    %v513 = vmul.f32 %v508, %v512
    %514 = vmatpush.xpose.msra.mxu0 0.0
    %515 = vmatpush.xpose.msra.mxu0 0.0
    %516 = vmatpush.xpose.msra.mxu0 0.0
    %517 = vmatpush.xpose.msra.mxu0 0.0
    %518 = vmatpush.xpose.msra.mxu0 0.0
    %519 = vmatpush.xpose.msra.mxu0 0.0
    %520 = vmatpush.xpose.msra.mxu0 0.0
    %521 = vmatpush.xpose.msra.mxu0 0.0
    %522 = vmatpush.xpose.msra.mxu0 0.0
    %523 = vmatpush.xpose.msra.mxu0 0.0
    %524 = vmatpush.xpose.msra.mxu0 0.0
    %525 = vmatpush.xpose.msra.mxu0 0.0
    %526 = vmatpush.xpose.msra.mxu0 0.0
    %527 = vmatpush.xpose.msra.mxu0 0.0
    %528 = vmatpush.xpose.msra.mxu0 0.0
    %529 = vmatpush.xpose.msra.mxu0 %v195
    %530 = vmatmul.f32.gmra.mxu0 %v243
    %v531 = vpop.f32.mrf.mxu0
    %v532 = vadd.f32 0.0, %v531
    %533 = vdwg.mxu0
    %v534 = vsel %vm258, %v532, -1e+30
    %v535 = vsel %vm280, %v534, -inf
    %536 = vmax.xlane.f32.xlu0 %v535
    %v537 = vpop.xlane.xlu0 %536
    %v538 = vsub.f32 %v534, %v537
    %v539 = vmul.f32 %v538, 1.442695
    %v540 = vpow.pop %v539
    %v541 = vsel %vm280, %v540, 0.0
    %542 = vadd.xlane.f32.xlu0 %v541
    %v543 = vpop.xlane.xlu0 %542
    %v544 = vrcp.pop %v543
    %v545 = vmul.f32 %v540, %v544
    %v547 = vsel %vm280, %v545, 0
    %549 = vmatpush.msra.mxu0 0.0
    %550 = vmatpush.msra.mxu0 0.0
    %551 = vmatpush.msra.mxu0 0.0
    %552 = vmatpush.msra.mxu0 0.0
    %553 = vmatpush.msra.mxu0 0.0
    %554 = vmatpush.msra.mxu0 0.0
    %555 = vmatpush.msra.mxu0 0.0
    %556 = vmatpush.msra.mxu0 0.0
    %557 = vmatpush.msra.mxu0 0.0
    %558 = vmatpush.msra.mxu0 0.0
    %559 = vmatpush.msra.mxu0 0.0
    %560 = vmatpush.msra.mxu0 0.0
    %561 = vmatpush.msra.mxu0 0.0
    %562 = vmatpush.msra.mxu0 0.0
    %563 = vmatpush.msra.mxu0 0.0
    %564 = vmatpush.msra.mxu0 %v251
    %565 = vmatmul.f32.gmra.mxu0 %v547
    %v566 = vpop.f32.mrf.mxu0
    %v567 = vadd.f32 0.0, %v566
    %568 = vdwg.mxu0
    %v570 = vsel %vm280, %v513, 0
    %572 = vmatpush.msra.mxu0 0.0
    %573 = vmatpush.msra.mxu0 0.0
    %574 = vmatpush.msra.mxu0 0.0
    %575 = vmatpush.msra.mxu0 0.0
    %576 = vmatpush.msra.mxu0 0.0
    %577 = vmatpush.msra.mxu0 0.0
    %578 = vmatpush.msra.mxu0 0.0
    %579 = vmatpush.msra.mxu0 0.0
    %580 = vmatpush.msra.mxu0 0.0
    %581 = vmatpush.msra.mxu0 0.0
    %582 = vmatpush.msra.mxu0 0.0
    %583 = vmatpush.msra.mxu0 0.0
    %584 = vmatpush.msra.mxu0 0.0
    %585 = vmatpush.msra.mxu0 0.0
    %586 = vmatpush.msra.mxu0 0.0
    %587 = vmatpush.msra.mxu0 %v249
    %588 = vmatmul.f32.gmra.mxu0 %v570
    %v589 = vpop.f32.mrf.mxu0
    %v590 = vadd.f32 %v567, %v589
    %591 = vdwg.mxu0
    %592 = vmatpush.xpose.msra.mxu0 0.0
    %593 = vmatpush.xpose.msra.mxu0 0.0
    %594 = vmatpush.xpose.msra.mxu0 0.0
    %595 = vmatpush.xpose.msra.mxu0 0.0
    %596 = vmatpush.xpose.msra.mxu0 0.0
    %597 = vmatpush.xpose.msra.mxu0 0.0
    %598 = vmatpush.xpose.msra.mxu0 0.0
    %599 = vmatpush.xpose.msra.mxu0 0.0
    %600 = vmatpush.xpose.msra.mxu0 0.0
    %601 = vmatpush.xpose.msra.mxu0 0.0
    %602 = vmatpush.xpose.msra.mxu0 0.0
    %603 = vmatpush.xpose.msra.mxu0 0.0
    %604 = vmatpush.xpose.msra.mxu0 0.0
    %605 = vmatpush.xpose.msra.mxu0 0.0
    %606 = vmatpush.xpose.msra.mxu0 0.0
    %607 = vmatpush.xpose.msra.mxu0 %v195
    %608 = vmatmul.f32.gmra.mxu0 %v245
    %v609 = vpop.f32.mrf.mxu0
    %v610 = vadd.f32 0.0, %v609
    %611 = vdwg.mxu0
    %v612 = vsel %vm258, %v610, -1e+30
    %v613 = vsel %vm280, %v612, -inf
    %614 = vmax.xlane.f32.xlu0 %v613
    %v615 = vpop.xlane.xlu0 %614
    %v616 = vsub.f32 %v612, %v615
    %v617 = vmul.f32 %v616, 1.442695
    %v618 = vpow.pop %v617
    %v619 = vsel %vm280, %v618, 0.0
    %620 = vadd.xlane.f32.xlu0 %v619
    %v621 = vpop.xlane.xlu0 %620
    %v622 = vrcp.pop %v621
    %v623 = vmul.f32 %v618, %v622
    %v625 = vsel %vm280, %v623, 0
    %627 = vmatpush.msra.mxu0 0.0
    %628 = vmatpush.msra.mxu0 0.0
    %629 = vmatpush.msra.mxu0 0.0
    %630 = vmatpush.msra.mxu0 0.0
    %631 = vmatpush.msra.mxu0 0.0
    %632 = vmatpush.msra.mxu0 0.0
    %633 = vmatpush.msra.mxu0 0.0
    %634 = vmatpush.msra.mxu0 0.0
    %635 = vmatpush.msra.mxu0 0.0
    %636 = vmatpush.msra.mxu0 0.0
    %637 = vmatpush.msra.mxu0 0.0
    %638 = vmatpush.msra.mxu0 0.0
    %639 = vmatpush.msra.mxu0 0.0
    %640 = vmatpush.msra.mxu0 0.0
    %641 = vmatpush.msra.mxu0 0.0
    %642 = vmatpush.msra.mxu0 %v253
    %643 = vmatmul.f32.gmra.mxu0 %v625
    %v644 = vpop.f32.mrf.mxu0
    %v645 = vadd.f32 0.0, %v644
    %646 = vdwg.mxu0
    %v647 = vadd.f32 %v590, %v645
    %648 = vmatpush.xpose.msra.mxu0 0.0
    %649 = vmatpush.xpose.msra.mxu0 0.0
    %650 = vmatpush.xpose.msra.mxu0 0.0
    %651 = vmatpush.xpose.msra.mxu0 0.0
    %652 = vmatpush.xpose.msra.mxu0 0.0
    %653 = vmatpush.xpose.msra.mxu0 0.0
    %654 = vmatpush.xpose.msra.mxu0 0.0
    %655 = vmatpush.xpose.msra.mxu0 0.0
    %656 = vmatpush.xpose.msra.mxu0 0.0
    %657 = vmatpush.xpose.msra.mxu0 0.0
    %658 = vmatpush.xpose.msra.mxu0 0.0
    %659 = vmatpush.xpose.msra.mxu0 0.0
    %660 = vmatpush.xpose.msra.mxu0 0.0
    %661 = vmatpush.xpose.msra.mxu0 0.0
    %662 = vmatpush.xpose.msra.mxu0 0.0
    %663 = vmatpush.xpose.msra.mxu0 %v195
    %664 = vmatmul.f32.gmra.mxu0 %v247
    %v665 = vpop.f32.mrf.mxu0
    %v666 = vadd.f32 0.0, %v665
    %667 = vdwg.mxu0
    %v668 = vsel %vm258, %v666, -1e+30
    %v669 = vsel %vm280, %v668, -inf
    %670 = vmax.xlane.f32.xlu0 %v669
    %v671 = vpop.xlane.xlu0 %670
    %v672 = vsub.f32 %v668, %v671
    %v673 = vmul.f32 %v672, 1.442695
    %v674 = vpow.pop %v673
    %v675 = vsel %vm280, %v674, 0.0
    %676 = vadd.xlane.f32.xlu0 %v675
    %v677 = vpop.xlane.xlu0 %676
    %v678 = vrcp.pop %v677
    %v679 = vmul.f32 %v674, %v678
    %v681 = vsel %vm280, %v679, 0
    %683 = vmatpush.msra.mxu0 0.0
    %684 = vmatpush.msra.mxu0 0.0
    %685 = vmatpush.msra.mxu0 0.0
    %686 = vmatpush.msra.mxu0 0.0
    %687 = vmatpush.msra.mxu0 0.0
    %688 = vmatpush.msra.mxu0 0.0
    %689 = vmatpush.msra.mxu0 0.0
    %690 = vmatpush.msra.mxu0 0.0
    %691 = vmatpush.msra.mxu0 0.0
    %692 = vmatpush.msra.mxu0 0.0
    %693 = vmatpush.msra.mxu0 0.0
    %694 = vmatpush.msra.mxu0 0.0
    %695 = vmatpush.msra.mxu0 0.0
    %696 = vmatpush.msra.mxu0 0.0
    %697 = vmatpush.msra.mxu0 0.0
    %698 = vmatpush.msra.mxu0 %v255
    %699 = vmatmul.f32.gmra.mxu0 %v681
    %v700 = vpop.f32.mrf.mxu0
    %v701 = vadd.f32 0.0, %v700
    %702 = vdwg.mxu0
    %v703 = vadd.f32 %v647, %v701
    %v704 = vld [vmem:[%s2] sm:$0xff]
    %v705 = vld [vmem:[%s2 + $0x8] sm:$0xff]
    %v706 = vld [vmem:[%s2 + $0x10] sm:$0xff]
    %v707 = vld [vmem:[%s2 + $0x18] sm:$0xff]
    %v708 = vld [vmem:[%s2 + $0x20] sm:$0xff]
    %v709 = vld [vmem:[%s2 + $0x28] sm:$0xff]
    %v710 = vld [vmem:[%s2 + $0x30] sm:$0xff]
    %v711 = vld [vmem:[%s2 + $0x38] sm:$0xff]
    %v712 = vld [vmem:[%s2 + $0x40] sm:$0xff]
    %v713 = vld [vmem:[%s2 + $0x48] sm:$0xff]
    %v714 = vld [vmem:[%s2 + $0x50] sm:$0xff]
    %v715 = vld [vmem:[%s2 + $0x58] sm:$0xff]
    %v716 = vld [vmem:[%s2 + $0x60] sm:$0xff]
    %v717 = vld [vmem:[%s2 + $0x68] sm:$0xff]
    %v718 = vld [vmem:[%s2 + $0x70] sm:$0xff]
    %v719 = vld [vmem:[%s2 + $0x78] sm:$0xff]
    %v720 = vld [vmem:[%s3] sm:$0x1]
    %v722 = vperm.slane %v720, 0
    %724 = vmatpush.msra.mxu0 %v719
    %725 = vmatpush.msra.mxu0 %v718
    %726 = vmatpush.msra.mxu0 %v717
    %727 = vmatpush.msra.mxu0 %v716
    %728 = vmatpush.msra.mxu0 %v715
    %729 = vmatpush.msra.mxu0 %v714
    %730 = vmatpush.msra.mxu0 %v713
    %731 = vmatpush.msra.mxu0 %v712
    %732 = vmatpush.msra.mxu0 %v711
    %733 = vmatpush.msra.mxu0 %v710
    %734 = vmatpush.msra.mxu0 %v709
    %735 = vmatpush.msra.mxu0 %v708
    %736 = vmatpush.msra.mxu0 %v707
    %737 = vmatpush.msra.mxu0 %v706
    %738 = vmatpush.msra.mxu0 %v705
    %739 = vmatpush.msra.mxu0 %v704
    %740 = vmatmul.f32.gmra.mxu0 %v481
    %v741 = vpop.f32.mrf.mxu0
    %v742 = vadd.f32 %v722, %v741
    %743 = vmatmul.f32.gmra.mxu0 %v703
    %v744 = vpop.f32.mrf.mxu0
    %v745 = vadd.f32 %v722, %v744
    %746 = vdwg.mxu0
    %v747 = vadd.f32 %v42, %v742
    %v748 = vadd.f32 %v43, %v745
    %v749 = vld [vmem:[%s6] sm:$0x1]
    %v750 = vld [vmem:[%s7] sm:$0x1]
    %751 = vadd.xlane.f32.xlu0 %v747
    %v752 = vpop.xlane.xlu0 %751
    %753 = vadd.xlane.f32.xlu0 %v748
    %v754 = vpop.xlane.xlu0 %753
    %v755 = vmul.f32 %v752, 0.01
    %v756 = vmul.f32 %v754, 0.01
    %v757 = vsub.f32 %v747, %v755
    %v758 = vsub.f32 %v748, %v756
    %v759 = vmul.f32 %v757, %v757
    %v760 = vmul.f32 %v758, %v758
    %v761 = vmul.f32 %v759, %v48
    %v762 = vmul.f32 %v760, %v48
    %763 = vadd.xlane.f32.xlu0 %v761
    %v764 = vpop.xlane.xlu0 %763
    %765 = vadd.xlane.f32.xlu0 %v762
    %v766 = vpop.xlane.xlu0 %765
    %v767 = vmul.f32 %v764, 0.01
    %v768 = vmul.f32 %v766, 0.01
    %v769 = vadd.f32 %v767, 1e-05
    %v770 = vadd.f32 %v768, 1e-05
    %v771 = vrsqrt.pop %v769
    %v772 = vmul.f32 %v771, %v769
    %v773 = vmul.f32 %v772, %v771
    %v774 = vmul.f32 0.5, %v773
    %v775 = vsub.f32 1.5, %v774
    %v776 = vmul.f32 %v771, %v775
    %vm777 = vweird.f32 %v769
    %vm778 = vweird.f32 %v771
    %vm779 = vmor %vm777, %vm778
    %v780 = vsel %vm779, %v771, %v776
    %v781 = vrsqrt.pop %v770
    %v782 = vmul.f32 %v781, %v770
    %v783 = vmul.f32 %v782, %v781
    %v784 = vmul.f32 0.5, %v783
    %v785 = vsub.f32 1.5, %v784
    %v786 = vmul.f32 %v781, %v785
    %vm787 = vweird.f32 %v770
    %vm788 = vweird.f32 %v781
    %vm789 = vmor %vm787, %vm788
    %v790 = vsel %vm789, %v781, %v786
    %v791 = vmul.f32 %v757, %v780
    %v792 = vmul.f32 %v758, %v790
    %v794 = vperm.slane %v749, 0
    %v796 = vmul.f32 %v791, %v794
    %v797 = vmul.f32 %v792, %v794
    %v799 = vperm.slane %v750, 0
    %v801 = vadd.f32 %v796, %v799
    %v802 = vadd.f32 %v797, %v799
    %v803 = vld [vmem:[%s8] sm:$0xff]
    %v804 = vld [vmem:[%s8 + $0x8] sm:$0xff]
    %v805 = vld [vmem:[%s8 + $0x10] sm:$0xff]
    %v806 = vld [vmem:[%s8 + $0x18] sm:$0xff]
    %v807 = vld [vmem:[%s8 + $0x20] sm:$0xff]
    %v808 = vld [vmem:[%s8 + $0x28] sm:$0xff]
    %v809 = vld [vmem:[%s8 + $0x30] sm:$0xff]
    %v810 = vld [vmem:[%s8 + $0x38] sm:$0xff]
    %v811 = vld [vmem:[%s8 + $0x40] sm:$0xff]
    %v812 = vld [vmem:[%s8 + $0x48] sm:$0xff]
    %v813 = vld [vmem:[%s8 + $0x50] sm:$0xff]
    %v814 = vld [vmem:[%s8 + $0x58] sm:$0xff]
    %v815 = vld [vmem:[%s8 + $0x60] sm:$0xff]
    %v816 = vld [vmem:[%s8 + $0x68] sm:$0xff]
    %v817 = vld [vmem:[%s8 + $0x70] sm:$0xff]
    %v818 = vld [vmem:[%s8 + $0x78] sm:$0xff]
    %v819 = vld [vmem:[%s8 + $0x80] sm:$0xff]
    %v820 = vld [vmem:[%s8 + $0x88] sm:$0xff]
    %v821 = vld [vmem:[%s8 + $0x90] sm:$0xff]
    %v822 = vld [vmem:[%s8 + $0x98] sm:$0xff]
    %v823 = vld [vmem:[%s8 + $0xa0] sm:$0xff]
    %v824 = vld [vmem:[%s8 + $0xa8] sm:$0xff]
    %v825 = vld [vmem:[%s8 + $0xb0] sm:$0xff]
    %v826 = vld [vmem:[%s8 + $0xb8] sm:$0xff]
    %v827 = vld [vmem:[%s8 + $0xc0] sm:$0xff]
    %v828 = vld [vmem:[%s8 + $0xc8] sm:$0xff]
    %v829 = vld [vmem:[%s8 + $0xd0] sm:$0xff]
    %v830 = vld [vmem:[%s8 + $0xd8] sm:$0xff]
    %v831 = vld [vmem:[%s8 + $0xe0] sm:$0xff]
    %v832 = vld [vmem:[%s8 + $0xe8] sm:$0xff]
    %v833 = vld [vmem:[%s8 + $0xf0] sm:$0xff]
    %v834 = vld [vmem:[%s8 + $0xf8] sm:$0xff]
    %v835 = vld [vmem:[%s8 + $0x100] sm:$0xff]
    %v836 = vld [vmem:[%s8 + $0x108] sm:$0xff]
    %v837 = vld [vmem:[%s8 + $0x110] sm:$0xff]
    %v838 = vld [vmem:[%s8 + $0x118] sm:$0xff]
    %v839 = vld [vmem:[%s8 + $0x120] sm:$0xff]
    %v840 = vld [vmem:[%s8 + $0x128] sm:$0xff]
    %v841 = vld [vmem:[%s8 + $0x130] sm:$0xff]
    %v842 = vld [vmem:[%s8 + $0x138] sm:$0xff]
    %v843 = vld [vmem:[%s8 + $0x140] sm:$0xff]
    %v844 = vld [vmem:[%s8 + $0x148] sm:$0xff]
    %v845 = vld [vmem:[%s8 + $0x150] sm:$0xff]
    %v846 = vld [vmem:[%s8 + $0x158] sm:$0xff]
    %v847 = vld [vmem:[%s8 + $0x160] sm:$0xff]
    %v848 = vld [vmem:[%s8 + $0x168] sm:$0xff]
    %v849 = vld [vmem:[%s8 + $0x170] sm:$0xff]
    %v850 = vld [vmem:[%s8 + $0x178] sm:$0xff]
    %v851 = vld [vmem:[%s8 + $0x180] sm:$0xff]
    %v852 = vld [vmem:[%s8 + $0x188] sm:$0xff]
    %v853 = vld [vmem:[%s8 + $0x190] sm:$0xff]
    %v854 = vld [vmem:[%s8 + $0x198] sm:$0xff]
    %v855 = vld [vmem:[%s8 + $0x1a0] sm:$0xff]
    %v856 = vld [vmem:[%s8 + $0x1a8] sm:$0xff]
    %v857 = vld [vmem:[%s8 + $0x1b0] sm:$0xff]
    %v858 = vld [vmem:[%s8 + $0x1b8] sm:$0xff]
    %v859 = vld [vmem:[%s8 + $0x1c0] sm:$0xff]
    %v860 = vld [vmem:[%s8 + $0x1c8] sm:$0xff]
    %v861 = vld [vmem:[%s8 + $0x1d0] sm:$0xff]
    %v862 = vld [vmem:[%s8 + $0x1d8] sm:$0xff]
    %v863 = vld [vmem:[%s8 + $0x1e0] sm:$0xff]
    %v864 = vld [vmem:[%s8 + $0x1e8] sm:$0xff]
    %v865 = vld [vmem:[%s8 + $0x1f0] sm:$0xff]
    %v866 = vld [vmem:[%s8 + $0x1f8] sm:$0xff]
    %v867 = vld [vmem:[%s9] sm:$0xf]
    %v869 = vperm.slane %v867, 0
    %v870 = vperm.slane %v867, 1
    %v871 = vperm.slane %v867, 2
    %v872 = vperm.slane %v867, 3
    %877 = vmatpush.msra.mxu0 %v863
    %878 = vmatpush.msra.mxu0 %v859
    %879 = vmatpush.msra.mxu0 %v855
    %880 = vmatpush.msra.mxu0 %v851
    %881 = vmatpush.msra.mxu0 %v847
    %882 = vmatpush.msra.mxu0 %v843
    %883 = vmatpush.msra.mxu0 %v839
    %884 = vmatpush.msra.mxu0 %v835
    %885 = vmatpush.msra.mxu0 %v831
    %886 = vmatpush.msra.mxu0 %v827
    %887 = vmatpush.msra.mxu0 %v823
    %888 = vmatpush.msra.mxu0 %v819
    %889 = vmatpush.msra.mxu0 %v815
    %890 = vmatpush.msra.mxu0 %v811
    %891 = vmatpush.msra.mxu0 %v807
    %892 = vmatpush.msra.mxu0 %v803
    %893 = vmatmul.f32.gmra.mxu0 %v801
    %v894 = vpop.f32.mrf.mxu0
    %v895 = vadd.f32 %v869, %v894
    %896 = vmatmul.f32.gmra.mxu0 %v802
    %v897 = vpop.f32.mrf.mxu0
    %v898 = vadd.f32 %v869, %v897
    %899 = vdwg.mxu0
    %900 = vmatpush.msra.mxu0 %v864
    %901 = vmatpush.msra.mxu0 %v860
    %902 = vmatpush.msra.mxu0 %v856
    %903 = vmatpush.msra.mxu0 %v852
    %904 = vmatpush.msra.mxu0 %v848
    %905 = vmatpush.msra.mxu0 %v844
    %906 = vmatpush.msra.mxu0 %v840
    %907 = vmatpush.msra.mxu0 %v836
    %908 = vmatpush.msra.mxu0 %v832
    %909 = vmatpush.msra.mxu0 %v828
    %910 = vmatpush.msra.mxu0 %v824
    %911 = vmatpush.msra.mxu0 %v820
    %912 = vmatpush.msra.mxu0 %v816
    %913 = vmatpush.msra.mxu0 %v812
    %914 = vmatpush.msra.mxu0 %v808
    %915 = vmatpush.msra.mxu0 %v804
    %916 = vmatmul.f32.gmra.mxu0 %v801
    %v917 = vpop.f32.mrf.mxu0
    %v918 = vadd.f32 %v870, %v917
    %919 = vmatmul.f32.gmra.mxu0 %v802
    %v920 = vpop.f32.mrf.mxu0
    %v921 = vadd.f32 %v870, %v920
    %922 = vdwg.mxu0
    %923 = vmatpush.msra.mxu0 %v865
    %924 = vmatpush.msra.mxu0 %v861
    %925 = vmatpush.msra.mxu0 %v857
    %926 = vmatpush.msra.mxu0 %v853
    %927 = vmatpush.msra.mxu0 %v849
    %928 = vmatpush.msra.mxu0 %v845
    %929 = vmatpush.msra.mxu0 %v841
    %930 = vmatpush.msra.mxu0 %v837
    %931 = vmatpush.msra.mxu0 %v833
    %932 = vmatpush.msra.mxu0 %v829
    %933 = vmatpush.msra.mxu0 %v825
    %934 = vmatpush.msra.mxu0 %v821
    %935 = vmatpush.msra.mxu0 %v817
    %936 = vmatpush.msra.mxu0 %v813
    %937 = vmatpush.msra.mxu0 %v809
    %938 = vmatpush.msra.mxu0 %v805
    %939 = vmatmul.f32.gmra.mxu0 %v801
    %v940 = vpop.f32.mrf.mxu0
    %v941 = vadd.f32 %v871, %v940
    %942 = vmatmul.f32.gmra.mxu0 %v802
    %v943 = vpop.f32.mrf.mxu0
    %v944 = vadd.f32 %v871, %v943
    %945 = vdwg.mxu0
    %946 = vmatpush.msra.mxu0 %v866
    %947 = vmatpush.msra.mxu0 %v862
    %948 = vmatpush.msra.mxu0 %v858
    %949 = vmatpush.msra.mxu0 %v854
    %950 = vmatpush.msra.mxu0 %v850
    %951 = vmatpush.msra.mxu0 %v846
    %952 = vmatpush.msra.mxu0 %v842
    %953 = vmatpush.msra.mxu0 %v838
    %954 = vmatpush.msra.mxu0 %v834
    %955 = vmatpush.msra.mxu0 %v830
    %956 = vmatpush.msra.mxu0 %v826
    %957 = vmatpush.msra.mxu0 %v822
    %958 = vmatpush.msra.mxu0 %v818
    %959 = vmatpush.msra.mxu0 %v814
    %960 = vmatpush.msra.mxu0 %v810
    %961 = vmatpush.msra.mxu0 %v806
    %962 = vmatmul.f32.gmra.mxu0 %v801
    %v963 = vpop.f32.mrf.mxu0
    %v964 = vadd.f32 %v872, %v963
    %965 = vmatmul.f32.gmra.mxu0 %v802
    %v966 = vpop.f32.mrf.mxu0
    %v967 = vadd.f32 %v872, %v966
    %968 = vdwg.mxu0
    %v969 = vmax.f32 %v895, 0.0
    %v970 = vmax.f32 %v918, 0.0
    %v971 = vmax.f32 %v941, 0.0
    %v972 = vmax.f32 %v964, 0.0
    %v973 = vmax.f32 %v898, 0.0
    %v974 = vmax.f32 %v921, 0.0
    %v975 = vmax.f32 %v944, 0.0
    %v976 = vmax.f32 %v967, 0.0
    %v977 = vld [vmem:[%s10] sm:$0xff]
    %v978 = vld [vmem:[%s10 + $0x8] sm:$0xff]
    %v979 = vld [vmem:[%s10 + $0x10] sm:$0xff]
    %v980 = vld [vmem:[%s10 + $0x18] sm:$0xff]
    %v981 = vld [vmem:[%s10 + $0x20] sm:$0xff]
    %v982 = vld [vmem:[%s10 + $0x28] sm:$0xff]
    %v983 = vld [vmem:[%s10 + $0x30] sm:$0xff]
    %v984 = vld [vmem:[%s10 + $0x38] sm:$0xff]
    %v985 = vld [vmem:[%s10 + $0x40] sm:$0xff]
    %v986 = vld [vmem:[%s10 + $0x48] sm:$0xff]
    %v987 = vld [vmem:[%s10 + $0x50] sm:$0xff]
    %v988 = vld [vmem:[%s10 + $0x58] sm:$0xff]
    %v989 = vld [vmem:[%s10 + $0x60] sm:$0xff]
    %v990 = vld [vmem:[%s10 + $0x68] sm:$0xff]
    %v991 = vld [vmem:[%s10 + $0x70] sm:$0xff]
    %v992 = vld [vmem:[%s10 + $0x78] sm:$0xff]
    %v993 = vld [vmem:[%s10 + $0x80] sm:$0xff]
    %v994 = vld [vmem:[%s10 + $0x88] sm:$0xff]
    %v995 = vld [vmem:[%s10 + $0x90] sm:$0xff]
    %v996 = vld [vmem:[%s10 + $0x98] sm:$0xff]
    %v997 = vld [vmem:[%s10 + $0xa0] sm:$0xff]
    %v998 = vld [vmem:[%s10 + $0xa8] sm:$0xff]
    %v999 = vld [vmem:[%s10 + $0xb0] sm:$0xff]
    %v1000 = vld [vmem:[%s10 + $0xb8] sm:$0xff]
    %v1001 = vld [vmem:[%s10 + $0xc0] sm:$0xff]
    %v1002 = vld [vmem:[%s10 + $0xc8] sm:$0xff]
    %v1003 = vld [vmem:[%s10 + $0xd0] sm:$0xff]
    %v1004 = vld [vmem:[%s10 + $0xd8] sm:$0xff]
    %v1005 = vld [vmem:[%s10 + $0xe0] sm:$0xff]
    %v1006 = vld [vmem:[%s10 + $0xe8] sm:$0xff]
    %v1007 = vld [vmem:[%s10 + $0xf0] sm:$0xff]
    %v1008 = vld [vmem:[%s10 + $0xf8] sm:$0xff]
    %v1009 = vld [vmem:[%s10 + $0x100] sm:$0xff]
    %v1010 = vld [vmem:[%s10 + $0x108] sm:$0xff]
    %v1011 = vld [vmem:[%s10 + $0x110] sm:$0xff]
    %v1012 = vld [vmem:[%s10 + $0x118] sm:$0xff]
    %v1013 = vld [vmem:[%s10 + $0x120] sm:$0xff]
    %v1014 = vld [vmem:[%s10 + $0x128] sm:$0xff]
    %v1015 = vld [vmem:[%s10 + $0x130] sm:$0xff]
    %v1016 = vld [vmem:[%s10 + $0x138] sm:$0xff]
    %v1017 = vld [vmem:[%s10 + $0x140] sm:$0xff]
    %v1018 = vld [vmem:[%s10 + $0x148] sm:$0xff]
    %v1019 = vld [vmem:[%s10 + $0x150] sm:$0xff]
    %v1020 = vld [vmem:[%s10 + $0x158] sm:$0xff]
    %v1021 = vld [vmem:[%s10 + $0x160] sm:$0xff]
    %v1022 = vld [vmem:[%s10 + $0x168] sm:$0xff]
    %v1023 = vld [vmem:[%s10 + $0x170] sm:$0xff]
    %v1024 = vld [vmem:[%s10 + $0x178] sm:$0xff]
    %v1025 = vld [vmem:[%s10 + $0x180] sm:$0xff]
    %v1026 = vld [vmem:[%s10 + $0x188] sm:$0xff]
    %v1027 = vld [vmem:[%s10 + $0x190] sm:$0xff]
    %v1028 = vld [vmem:[%s10 + $0x198] sm:$0xff]
    %v1029 = vld [vmem:[%s10 + $0x1a0] sm:$0xff]
    %v1030 = vld [vmem:[%s10 + $0x1a8] sm:$0xff]
    %v1031 = vld [vmem:[%s10 + $0x1b0] sm:$0xff]
    %v1032 = vld [vmem:[%s10 + $0x1b8] sm:$0xff]
    %v1033 = vld [vmem:[%s10 + $0x1c0] sm:$0xff]
    %v1034 = vld [vmem:[%s10 + $0x1c8] sm:$0xff]
    %v1035 = vld [vmem:[%s10 + $0x1d0] sm:$0xff]
    %v1036 = vld [vmem:[%s10 + $0x1d8] sm:$0xff]
    %v1037 = vld [vmem:[%s10 + $0x1e0] sm:$0xff]
    %v1038 = vld [vmem:[%s10 + $0x1e8] sm:$0xff]
    %v1039 = vld [vmem:[%s10 + $0x1f0] sm:$0xff]
    %v1040 = vld [vmem:[%s10 + $0x1f8] sm:$0xff]
    %v1041 = vld [vmem:[%s11] sm:$0x1]
    %v1043 = vperm.slane %v1041, 0
    %1045 = vmatpush.msra.mxu0 %v992
    %1046 = vmatpush.msra.mxu0 %v991
    %1047 = vmatpush.msra.mxu0 %v990
    %1048 = vmatpush.msra.mxu0 %v989
    %1049 = vmatpush.msra.mxu0 %v988
    %1050 = vmatpush.msra.mxu0 %v987
    %1051 = vmatpush.msra.mxu0 %v986
    %1052 = vmatpush.msra.mxu0 %v985
    %1053 = vmatpush.msra.mxu0 %v984
    %1054 = vmatpush.msra.mxu0 %v983
    %1055 = vmatpush.msra.mxu0 %v982
    %1056 = vmatpush.msra.mxu0 %v981
    %1057 = vmatpush.msra.mxu0 %v980
    %1058 = vmatpush.msra.mxu0 %v979
    %1059 = vmatpush.msra.mxu0 %v978
    %1060 = vmatpush.msra.mxu0 %v977
    %1061 = vmatmul.f32.gmra.mxu0 %v969
    %v1062 = vpop.f32.mrf.mxu0
    %v1063 = vadd.f32 %v1043, %v1062
    %1064 = vmatmul.f32.gmra.mxu0 %v973
    %v1065 = vpop.f32.mrf.mxu0
    %v1066 = vadd.f32 %v1043, %v1065
    %1067 = vdwg.mxu0
    %1068 = vmatpush.msra.mxu0 %v1008
    %1069 = vmatpush.msra.mxu0 %v1007
    %1070 = vmatpush.msra.mxu0 %v1006
    %1071 = vmatpush.msra.mxu0 %v1005
    %1072 = vmatpush.msra.mxu0 %v1004
    %1073 = vmatpush.msra.mxu0 %v1003
    %1074 = vmatpush.msra.mxu0 %v1002
    %1075 = vmatpush.msra.mxu0 %v1001
    %1076 = vmatpush.msra.mxu0 %v1000
    %1077 = vmatpush.msra.mxu0 %v999
    %1078 = vmatpush.msra.mxu0 %v998
    %1079 = vmatpush.msra.mxu0 %v997
    %1080 = vmatpush.msra.mxu0 %v996
    %1081 = vmatpush.msra.mxu0 %v995
    %1082 = vmatpush.msra.mxu0 %v994
    %1083 = vmatpush.msra.mxu0 %v993
    %1084 = vmatmul.f32.gmra.mxu0 %v970
    %v1085 = vpop.f32.mrf.mxu0
    %v1086 = vadd.f32 %v1063, %v1085
    %1087 = vmatmul.f32.gmra.mxu0 %v974
    %v1088 = vpop.f32.mrf.mxu0
    %v1089 = vadd.f32 %v1066, %v1088
    %1090 = vdwg.mxu0
    %1091 = vmatpush.msra.mxu0 %v1024
    %1092 = vmatpush.msra.mxu0 %v1023
    %1093 = vmatpush.msra.mxu0 %v1022
    %1094 = vmatpush.msra.mxu0 %v1021
    %1095 = vmatpush.msra.mxu0 %v1020
    %1096 = vmatpush.msra.mxu0 %v1019
    %1097 = vmatpush.msra.mxu0 %v1018
    %1098 = vmatpush.msra.mxu0 %v1017
    %1099 = vmatpush.msra.mxu0 %v1016
    %1100 = vmatpush.msra.mxu0 %v1015
    %1101 = vmatpush.msra.mxu0 %v1014
    %1102 = vmatpush.msra.mxu0 %v1013
    %1103 = vmatpush.msra.mxu0 %v1012
    %1104 = vmatpush.msra.mxu0 %v1011
    %1105 = vmatpush.msra.mxu0 %v1010
    %1106 = vmatpush.msra.mxu0 %v1009
    %1107 = vmatmul.f32.gmra.mxu0 %v971
    %v1108 = vpop.f32.mrf.mxu0
    %v1109 = vadd.f32 %v1086, %v1108
    %1110 = vmatmul.f32.gmra.mxu0 %v975
    %v1111 = vpop.f32.mrf.mxu0
    %v1112 = vadd.f32 %v1089, %v1111
    %1113 = vdwg.mxu0
    %1114 = vmatpush.msra.mxu0 %v1040
    %1115 = vmatpush.msra.mxu0 %v1039
    %1116 = vmatpush.msra.mxu0 %v1038
    %1117 = vmatpush.msra.mxu0 %v1037
    %1118 = vmatpush.msra.mxu0 %v1036
    %1119 = vmatpush.msra.mxu0 %v1035
    %1120 = vmatpush.msra.mxu0 %v1034
    %1121 = vmatpush.msra.mxu0 %v1033
    %1122 = vmatpush.msra.mxu0 %v1032
    %1123 = vmatpush.msra.mxu0 %v1031
    %1124 = vmatpush.msra.mxu0 %v1030
    %1125 = vmatpush.msra.mxu0 %v1029
    %1126 = vmatpush.msra.mxu0 %v1028
    %1127 = vmatpush.msra.mxu0 %v1027
    %1128 = vmatpush.msra.mxu0 %v1026
    %1129 = vmatpush.msra.mxu0 %v1025
    %1130 = vmatmul.f32.gmra.mxu0 %v972
    %v1131 = vpop.f32.mrf.mxu0
    %v1132 = vadd.f32 %v1109, %v1131
    %1133 = vmatmul.f32.gmra.mxu0 %v976
    %v1134 = vpop.f32.mrf.mxu0
    %v1135 = vadd.f32 %v1112, %v1134
    %1136 = vdwg.mxu0
    %v1137 = vadd.f32 %v747, %v1132
    %v1138 = vadd.f32 %v748, %v1135
    %1139 = vst [vmem:[#allocation2] sm:$0xff] %v1137
    %1140 = vst [vmem:[#allocation2 + $0x8] sm:$0xff] %v1138
    // Predicated region
    $region50: #{block_forward.1} parent=1 // pred_check
      _
    $region51: #{block_forward.1} parent=1 // pred_check_branch
      %1142 = sbr.rel (0) target = $region53
    $region52: #{block_forward.1} parent=1 // pred_region
      %1144 = vsyncadd [#allocation3], 0
      %s1145 = sshll.u32 [#allocation2], 4
      %s1146 = int_to_ptr.vmem [resolvable:$true] %s1145
      %s1147 = sshll.u32 %s12, 4
      %s1148 = int_to_ptr.hbm [resolvable:$true] %s1147
      %1153 = dma.vmem_to_hbm [thread:$0]  %s1146, 256, %s1148, [#allocation3], 128, 128, 8
    $region53: #{block_forward.1} parent=1 // pred_fallthru
      _
    // Predicated region
    $region54: #{block_forward.1} parent=1 // pred_check
      _
    $region55: #{block_forward.1} parent=1 // pred_check_branch
      %1155 = sbr.rel (0) target = $region57
    $region56: #{block_forward.1} parent=1 // pred_region
      %1157 = dma.done [#allocation3], 256
    $region57: #{block_forward.1} parent=1 // pred_fallthru
      _
    %1158 = vsyncpa [#allocation3], 1

</llo_original>
